<compile_context>
chip_gen: v6e
topology: v6e:2x2x1
jax: 0.10.0
libtpu: 0.0.40
codegen_flags: <defaults>
</compile_context>

<pallas_src>
import jax
import jax.numpy as jnp
from jax import lax
from jax.experimental import pallas as pl
from jax.experimental.pallas import tpu as pltpu


def _shift_taps_cat(a):
    """(R, W, C) -> (R*W, 3*C) bf16; lanes are [x[:,w-1] | x[:,w] | x[:,w+1]]
    with zeros at the W edges (the conv's zero padding along W)."""
    R, W, C = a.shape
    a32 = a.astype(jnp.float32)
    zcol = jnp.zeros((R, 1, C), jnp.float32)
    left = jnp.concatenate([zcol, a32[:, : W - 1, :]], axis=1)     # x[:, w-1]
    right = jnp.concatenate([a32[:, 1:, :], zcol], axis=1)         # x[:, w+1]
    cat = jnp.concatenate([left, a32, right], axis=-1)             # (R, W, 3C)
    return cat.astype(jnp.bfloat16).reshape(R * W, 3 * C)


def _fused_seghead_kernel(xc_ref, xa_ref, xb_ref, w1_ref, w2_ref, o_ref):
    # xc_ref: (1, TH, W, Cin)   bf16  rows [r0, r0+TH)        (center band)
    # xa_ref: (1, 2,  W, Cin)   bf16  rows [r0-2, r0)         (garbage when r == 0)
    # xb_ref: (1, 2,  W, Cin)   bf16  rows [r0+TH, r0+TH+2)   (garbage when r == last)
    # w1_ref: (3, 3*Cin, Cmid)  bf16  (dy, dx-major x in-channel, out-channel)
    # w2_ref: (3, 3*Cmid, Cout) bf16
    # o_ref:  (1, TH, W, Cout)  f32
    r = pl.program_id(1)
    nr = pl.num_programs(1)

    _, TH, W, Cin = xc_ref.shape
    Cmid = w1_ref.shape[2]
    Cout = w2_ref.shape[2]
    f32 = jnp.float32
    zero_bf = jnp.zeros((), xc_ref.dtype)

    # ---- assemble the (TH+4, W, Cin) bf16 input band -------------------------
    # Halo rows come from the neighbouring bands; at the image border they are
    # replaced by zeros via selects (conv1's zero padding along H).
    top = jnp.where(r > 0, xa_ref[0], zero_bf)
    bot = jnp.where(r < nr - 1, xb_ref[0], zero_bf)
    xs = jnp.concatenate([top, xc_ref[0], bot], axis=0)            # (TH+4, W, Cin)

    # ---- conv1 + ReLU: mid rows [r0-1, r0+TH+1) -------------------------------
    # dx is folded into K: one matmul per dy with K = 3*Cin.
    x1 = _shift_taps_cat(xs)                                       # ((TH+4)*W, 3*Cin)
    S1 = (TH + 2) * W
    acc1 = jnp.dot(x1[0:S1], w1_ref[0], preferred_element_type=f32)
    acc1 = acc1 + jnp.dot(x1[W:W + S1], w1_ref[1], preferred_element_type=f32)
    acc1 = acc1 + jnp.dot(x1[2 * W:2 * W + S1], w1_ref[2], preferred_element_type=f32)

    # Out-of-image mid halo rows act as conv2's zero padding along H at the
    # image border; zero them with a select (no 0*Inf hazard, no divide).
    srow = lax.broadcasted_iota(jnp.int32, (S1, 1), 0)
    kill = ((r == 0) & (srow < W)) | ((r == nr - 1) & (srow >= (TH + 1) * W))
    mid = jnp.where(kill, 0.0, jnp.maximum(acc1, 0.0)).reshape(TH + 2, W, Cmid)

    # ---- conv2 + ReLU: output rows [r0, r0+TH) --------------------------------
    x2 = _shift_taps_cat(mid)                                      # ((TH+2)*W, 3*Cmid)
    S2 = TH * W
    acc2 = jnp.dot(x2[0:S2], w2_ref[0], preferred_element_type=f32)
    acc2 = acc2 + jnp.dot(x2[W:W + S2], w2_ref[1], preferred_element_type=f32)
    acc2 = acc2 + jnp.dot(x2[2 * W:2 * W + S2], w2_ref[2], preferred_element_type=f32)

    o_ref[0] = jnp.maximum(acc2, 0.0).reshape(TH, W, Cout).astype(o_ref.dtype)


def _vmem_caps():
    """(vmem_limit_bytes, per-tile budget_bytes), generation-aware."""
    try:
        cap = pltpu.get_tpu_info().vmem_capacity_bytes
    except Exception:
        cap = 128 << 20
    if cap < (96 << 20):              # v7x: 64 MiB VMEM per TensorCore
        return 40 << 20, 20 << 20
    return 96 << 20, 48 << 20          # v5e / v6e: 128 MiB VMEM


def _per_step_vmem_bytes(TH, W, cin, cmid, cout):
    """Conservative per-grid-step VMEM footprint: double-buffered pipeline
    blocks plus in-kernel value temps (f32 shift temps, 3*C concats, f32 accs)."""
    bf, f4 = 2, 4
    blocks = 2 * ((TH + 4) * W * cin * bf            # center + 2x 2-row halos (bf16)
                  + TH * W * cout * f4               # output block (f32)
                  + 9 * (cin * cmid + cmid * cout) * bf)
    band1 = (TH + 4) * W * cin * (4 * bf + 5 * f4)   # xs + cat(bf16) + l/r/cat(f32)
    band2 = (TH + 2) * W * cmid * (3 * bf + 7 * f4)  # cat(bf16) + acc/mid/l/r/cat(f32)
    outv = TH * W * cout * 2 * f4                    # acc2 + relu'd out
    return blocks + band1 + band2 + outv


def _pick_row_tile(N, H, W, cin, cmid, cout, budget_bytes):
    """Largest even divisor of H that keeps the blocks 8-sublane aligned
    (TH % 8 == 0 or TH == H) and fits the VMEM budget; prefers an even total
    parallel extent (balanced split across the 2 TensorCores on v7x)."""
    cands = [t for t in range(2, H + 1, 2)
             if H % t == 0 and (t % 8 == 0 or t == H)]
    if not cands:
        cands = [t for t in range(2, H + 1, 2) if H % t == 0]
    if not cands:
        raise ValueError("H must be even (2-row halo blocks).")
    fitting = [t for t in cands
               if _per_step_vmem_bytes(t, W, cin, cmid, cout) <= budget_bytes]
    if not fitting:
        fitting = [min(cands)]
    best = max(fitting)
    if (N * (H // best)) % 2:
        even = [t for t in fitting if (N * (H // t)) % 2 == 0]
        if even:
            best = max(even)
    return best


def fpn_seg_head_fused(x_nhwc, w1_hwio, w2_hwio, tile_rows=None):
    """relu(conv3x3(relu(conv3x3(x, w1)), w2)); both convs padding=1, bias-free."""
    N, H, W, Cin = x_nhwc.shape
    assert w1_hwio.shape[:3] == (3, 3, Cin)
    Cmid = w1_hwio.shape[3]
    assert w2_hwio.shape[:3] == (3, 3, Cmid)
    Cout = w2_hwio.shape[3]

    vmem_limit, tile_budget = _vmem_caps()
    TH = (_pick_row_tile(N, H, W, Cin, Cmid, Cout, tile_budget)
          if tile_rows is None else tile_rows)
    if TH % 2 or H % TH:
        raise ValueError("tile_rows must be even and divide H.")
    if TH % 8 and TH != H:
        raise ValueError("tile_rows must be a multiple of 8 (or equal to H).")
    half = TH // 2
    n_hblk2 = H // 2                   # number of 2-row halo blocks along H

    # bf16 activations on the wire (halves input HBM traffic); bf16 MXU weights
    # with dx folded into K: (3, 3, C, C') -> (3, 3*C, C'), dx-major rows.
    xb = x_nhwc.astype(jnp.bfloat16)
    w1k = w1_hwio.reshape(3, 3 * Cin, Cmid).astype(jnp.bfloat16)
    w2k = w2_hwio.reshape(3, 3 * Cmid, Cout).astype(jnp.bfloat16)

    return pl.pallas_call(
        _fused_seghead_kernel,
        out_shape=jax.ShapeDtypeStruct((N, H, W, Cout), jnp.float32),
        grid_spec=pltpu.PrefetchScalarGridSpec(
            num_scalar_prefetch=0,
            grid=(N, H // TH),
            in_specs=[
                # center band
                pl.BlockSpec((1, TH, W, Cin), lambda n, r: (n, r, 0, 0)),
                # 2-row halo above (clamped; zeroed in-kernel when r == 0)
                pl.BlockSpec((1, 2, W, Cin),
                             lambda n, r: (n, jnp.maximum(r * half - 1, 0), 0, 0)),
                # 2-row halo below (clamped; zeroed in-kernel when r == last)
                pl.BlockSpec((1, 2, W, Cin),
                             lambda n, r: (n, jnp.minimum((r + 1) * half,
                                                          n_hblk2 - 1), 0, 0)),
                # weights, revisited (constant block index) across the grid
                pl.BlockSpec((3, 3 * Cin, Cmid), lambda n, r: (0, 0, 0)),
                pl.BlockSpec((3, 3 * Cmid, Cout), lambda n, r: (0, 0, 0)),
            ],
            out_specs=pl.BlockSpec((1, TH, W, Cout), lambda n, r: (n, r, 0, 0)),
        ),
        compiler_params=pltpu.CompilerParams(
            dimension_semantics=("parallel", "parallel"),
            vmem_limit_bytes=int(vmem_limit),
        ),
        # TODO(synk): if profiling shows exposed DMA on the center band at small
        # Cin, sweep pipeline_mode=pl.Buffered(3) on that BlockSpec (not at max
        # TH on v7x).
    )(xb, xb, xb, w1k, w2k)


class FPNSegHeadPallas:
    """Pallas equivalent of FPNSegHead: relu(conv2(relu(conv1(x))))."""

    def __init__(self, in_channels, mid_channels, out_channels, key):
        k1, k2 = jax.random.split(key)
        self.w1 = jax.random.normal(k1, (3, 3, in_channels, mid_channels),
                                    dtype=jnp.float32) * 0.1
        self.w2 = jax.random.normal(k2, (3, 3, mid_channels, out_channels),
                                    dtype=jnp.float32) * 0.1

    def __call__(self, x_nchw, tile_rows=None):
        x = jnp.transpose(x_nchw, (0, 2, 3, 1))          # NCHW -> NHWC
        y = fpn_seg_head_fused(x, self.w1, self.w2, tile_rows=tile_rows)
        return jnp.transpose(y, (0, 3, 1, 2))            # NHWC -> NCHW


def _reference(x_nchw, w1_hwio, w2_hwio):
    def conv(x, w):
        return lax.conv_general_dilated(
            x, w, window_strides=(1, 1), padding="SAME",
            dimension_numbers=("NCHW", "HWIO", "NCHW"))
    y = jax.nn.relu(conv(x_nchw, w1_hwio))
    y = jax.nn.relu(conv(y, w2_hwio))
    return y


if __name__ == "__main__":
    key = jax.random.PRNGKey(0)
    k_x, k_w = jax.random.split(key)

    N, C_in, H, W = 2, 4, 16, 16
    C_mid, C_out = 8, 4

    x = jax.random.normal(k_x, (N, C_in, H, W), dtype=jnp.float32)
    head = FPNSegHeadPallas(C_in, C_mid, C_out, k_w)
    ref = _reference(x, head.w1, head.w2)

    # Explicit row tile exercises the first/interior/last halo paths; the
    # auto-picked tile covers the single-band (whole image) path.
    out_tiled = jax.block_until_ready(head(x, tile_rows=8))
    out_auto = jax.block_until_ready(head(x))

    assert out_tiled.shape == (N, C_out, H, W)
    assert out_auto.shape == (N, C_out, H, W)
    # bf16 MXU inputs with f32 accumulation -> small tolerance vs f32 reference.
    assert jnp.allclose(out_tiled, ref, rtol=3e-2, atol=3e-2), "tiled mismatch"
    assert jnp.allclose(out_auto, ref, rtol=3e-2, atol=3e-2), "auto-tile mismatch"
    assert jnp.max(jnp.abs(out_tiled - out_auto)) < 1e-5, "tiling-dependent result"

    print("KERNEL_OK")
</pallas_src>

<mosaic_0001>
module attributes {stable_mosaic.version = 11 : i64} {
  func.func @_fused_seghead_kernel(%arg0: i32, %arg1: i32, %arg2: memref<1x8x16x4xbf16, #tpu.memory_space<vmem>>, %arg3: memref<1x2x16x4xbf16, #tpu.memory_space<vmem>>, %arg4: memref<1x2x16x4xbf16, #tpu.memory_space<vmem>>, %arg5: memref<3x12x8xbf16, #tpu.memory_space<vmem>>, %arg6: memref<3x24x4xbf16, #tpu.memory_space<vmem>>, %arg7: memref<1x8x16x4xf32, #tpu.memory_space<vmem>>) attributes {dimension_semantics = [#tpu.dimension_semantics<parallel>, #tpu.dimension_semantics<parallel>], iteration_bounds = array<i64: 2, 2>, scalar_prefetch = 0 : i64, scratch_operands = 0 : i64, tpu.core_type = #tpu.core_type<tc>, window_params = [{transform_indices = @transform_0, window_bounds = array<i64: 1, 8, 16, 4>}, {transform_indices = @transform_1, window_bounds = array<i64: 1, 2, 16, 4>}, {transform_indices = @transform_2, window_bounds = array<i64: 1, 2, 16, 4>}, {pipeline_mode = #tpu.pipeline_mode<synchronous>, transform_indices = @transform_3, window_bounds = array<i64: 3, 12, 8>}, {pipeline_mode = #tpu.pipeline_mode<synchronous>, transform_indices = @transform_4, window_bounds = array<i64: 3, 24, 4>}, {transform_indices = @transform_5, window_bounds = array<i64: 1, 8, 16, 4>}]} {
    %c0_i32 = arith.constant 0 : i32
    %0 = arith.cmpi sgt, %arg1, %c0_i32 : i32
    %c0 = arith.constant 0 : index
    %c0_0 = arith.constant 0 : index
    %c0_1 = arith.constant 0 : index
    %c0_2 = arith.constant 0 : index
    %1 = vector.load %arg3[%c0, %c0_0, %c0_1, %c0_2] : memref<1x2x16x4xbf16, #tpu.memory_space<vmem>>, vector<1x2x16x4xbf16>
    %2 = vector.shape_cast %1 : vector<1x2x16x4xbf16> to vector<2x16x4xbf16>
    %cst = arith.constant 0.000000e+00 : bf16
    %3 = vector.broadcast %cst : bf16 to vector<2x16x4xbf16>
    %4 = arith.select %0, %2, %3 : vector<2x16x4xbf16>
    %c1_i32 = arith.constant 1 : i32
    %5 = arith.cmpi slt, %arg1, %c1_i32 : i32
    %c0_3 = arith.constant 0 : index
    %c0_4 = arith.constant 0 : index
    %c0_5 = arith.constant 0 : index
    %c0_6 = arith.constant 0 : index
    %6 = vector.load %arg4[%c0_3, %c0_4, %c0_5, %c0_6] : memref<1x2x16x4xbf16, #tpu.memory_space<vmem>>, vector<1x2x16x4xbf16>
    %7 = vector.shape_cast %6 : vector<1x2x16x4xbf16> to vector<2x16x4xbf16>
    %cst_7 = arith.constant 0.000000e+00 : bf16
    %8 = vector.broadcast %cst_7 : bf16 to vector<2x16x4xbf16>
    %9 = arith.select %5, %7, %8 : vector<2x16x4xbf16>
    %c0_8 = arith.constant 0 : index
    %c0_9 = arith.constant 0 : index
    %c0_10 = arith.constant 0 : index
    %c0_11 = arith.constant 0 : index
    %10 = vector.load %arg2[%c0_8, %c0_9, %c0_10, %c0_11] : memref<1x8x16x4xbf16, #tpu.memory_space<vmem>>, vector<1x8x16x4xbf16>
    %11 = vector.shape_cast %10 : vector<1x8x16x4xbf16> to vector<8x16x4xbf16>
    %12 = tpu.concatenate %4, %11, %9 in 0 : vector<2x16x4xbf16>, vector<8x16x4xbf16>, vector<2x16x4xbf16> -> vector<12x16x4xbf16>
    %13 = arith.extf %12 : vector<12x16x4xbf16> to vector<12x16x4xf32>
    %cst_12 = arith.constant 0.000000e+00 : f32
    %14 = vector.broadcast %cst_12 : f32 to vector<12x1x4xf32>
    %15 = vector.extract_strided_slice %13 {offsets = [0, 0, 0], sizes = [12, 15, 4], strides = [1, 1, 1]} : vector<12x16x4xf32> to vector<12x15x4xf32>
    %16 = tpu.concatenate %14, %15 in 1 : vector<12x1x4xf32>, vector<12x15x4xf32> -> vector<12x16x4xf32>
    %17 = vector.extract_strided_slice %13 {offsets = [0, 1, 0], sizes = [12, 15, 4], strides = [1, 1, 1]} : vector<12x16x4xf32> to vector<12x15x4xf32>
    %18 = tpu.concatenate %17, %14 in 1 : vector<12x15x4xf32>, vector<12x1x4xf32> -> vector<12x16x4xf32>
    %19 = tpu.concatenate %16, %13, %18 in 2 : vector<12x16x4xf32>, vector<12x16x4xf32>, vector<12x16x4xf32> -> vector<12x16x12xf32>
    %20 = arith.truncf %19 : vector<12x16x12xf32> to vector<12x16x12xbf16>
    %21 = vector.shape_cast %20 : vector<12x16x12xbf16> to vector<192x12xbf16>
    %22 = vector.extract_strided_slice %21 {offsets = [0, 0], sizes = [160, 12], strides = [1, 1]} : vector<192x12xbf16> to vector<160x12xbf16>
    %c0_13 = arith.constant 0 : index
    %c0_14 = arith.constant 0 : index
    %c0_15 = arith.constant 0 : index
    %23 = vector.load %arg5[%c0_13, %c0_14, %c0_15] : memref<3x12x8xbf16, #tpu.memory_space<vmem>>, vector<1x12x8xbf16>
    %24 = vector.shape_cast %23 : vector<1x12x8xbf16> to vector<12x8xbf16>
    %cst_16 = arith.constant dense<0.000000e+00> : vector<160x8xf32>
    %25 = tpu.matmul %22, %24, %cst_16 {dimension_numbers = #tpu.dot_dimension_numbers<[1], [0], [0], [1], [0, 0, 1, 1], [], []>} : vector<160x12xbf16>, vector<12x8xbf16>, vector<160x8xf32> -> vector<160x8xf32>
    %26 = vector.extract_strided_slice %21 {offsets = [16, 0], sizes = [160, 12], strides = [1, 1]} : vector<192x12xbf16> to vector<160x12xbf16>
    %c1 = arith.constant 1 : index
    %c0_17 = arith.constant 0 : index
    %c0_18 = arith.constant 0 : index
    %27 = vector.load %arg5[%c1, %c0_17, %c0_18] : memref<3x12x8xbf16, #tpu.memory_space<vmem>>, vector<1x12x8xbf16>
    %28 = vector.shape_cast %27 : vector<1x12x8xbf16> to vector<12x8xbf16>
    %cst_19 = arith.constant dense<0.000000e+00> : vector<160x8xf32>
    %29 = tpu.matmul %26, %28, %cst_19 {dimension_numbers = #tpu.dot_dimension_numbers<[1], [0], [0], [1], [0, 0, 1, 1], [], []>} : vector<160x12xbf16>, vector<12x8xbf16>, vector<160x8xf32> -> vector<160x8xf32>
    %30 = arith.addf %25, %29 : vector<160x8xf32>
    %31 = vector.extract_strided_slice %21 {offsets = [32, 0], sizes = [160, 12], strides = [1, 1]} : vector<192x12xbf16> to vector<160x12xbf16>
    %c2 = arith.constant 2 : index
    %c0_20 = arith.constant 0 : index
    %c0_21 = arith.constant 0 : index
    %32 = vector.load %arg5[%c2, %c0_20, %c0_21] : memref<3x12x8xbf16, #tpu.memory_space<vmem>>, vector<1x12x8xbf16>
    %33 = vector.shape_cast %32 : vector<1x12x8xbf16> to vector<12x8xbf16>
    %cst_22 = arith.constant dense<0.000000e+00> : vector<160x8xf32>
    %34 = tpu.matmul %31, %33, %cst_22 {dimension_numbers = #tpu.dot_dimension_numbers<[1], [0], [0], [1], [0, 0, 1, 1], [], []>} : vector<160x12xbf16>, vector<12x8xbf16>, vector<160x8xf32> -> vector<160x8xf32>
    %35 = arith.addf %30, %34 : vector<160x8xf32>
    %36 = tpu.iota {dimensions = array<i32: 0>} : vector<160x1xi32>
    %c0_i32_23 = arith.constant 0 : i32
    %37 = arith.cmpi eq, %arg1, %c0_i32_23 : i32
    %c16_i32 = arith.constant 16 : i32
    %38 = vector.broadcast %c16_i32 : i32 to vector<160x1xi32>
    %39 = arith.cmpi slt, %36, %38 : vector<160x1xi32>
    %40 = vector.broadcast %37 : i1 to vector<160x1xi1>
    %41 = arith.andi %40, %39 : vector<160x1xi1>
    %c1_i32_24 = arith.constant 1 : i32
    %42 = arith.cmpi eq, %arg1, %c1_i32_24 : i32
    %c144_i32 = arith.constant 144 : i32
    %43 = vector.broadcast %c144_i32 : i32 to vector<160x1xi32>
    %44 = arith.cmpi sge, %36, %43 : vector<160x1xi32>
    %45 = vector.broadcast %42 : i1 to vector<160x1xi1>
    %46 = arith.andi %45, %44 : vector<160x1xi1>
    %47 = arith.ori %41, %46 : vector<160x1xi1>
    %cst_25 = arith.constant 0.000000e+00 : f32
    %48 = vector.broadcast %cst_25 : f32 to vector<160x8xf32>
    %49 = arith.maximumf %35, %48 : vector<160x8xf32>
    %cst_26 = arith.constant 0.000000e+00 : f32
    %50 = vector.shape_cast %47 : vector<160x1xi1> to vector<160x1xi1>
    %51 = vector.broadcast %50 : vector<160x1xi1> to vector<160x8xi1>
    %52 = vector.broadcast %cst_26 : f32 to vector<160x8xf32>
    %53 = arith.select %51, %52, %49 : vector<160x8xi1>, vector<160x8xf32>
    %54 = vector.shape_cast %53 : vector<160x8xf32> to vector<10x16x8xf32>
    %cst_27 = arith.constant 0.000000e+00 : f32
    %55 = vector.broadcast %cst_27 : f32 to vector<10x1x8xf32>
    %56 = vector.extract_strided_slice %54 {offsets = [0, 0, 0], sizes = [10, 15, 8], strides = [1, 1, 1]} : vector<10x16x8xf32> to vector<10x15x8xf32>
    %57 = tpu.concatenate %55, %56 in 1 : vector<10x1x8xf32>, vector<10x15x8xf32> -> vector<10x16x8xf32>
    %58 = vector.extract_strided_slice %54 {offsets = [0, 1, 0], sizes = [10, 15, 8], strides = [1, 1, 1]} : vector<10x16x8xf32> to vector<10x15x8xf32>
    %59 = tpu.concatenate %58, %55 in 1 : vector<10x15x8xf32>, vector<10x1x8xf32> -> vector<10x16x8xf32>
    %60 = tpu.concatenate %57, %54, %59 in 2 : vector<10x16x8xf32>, vector<10x16x8xf32>, vector<10x16x8xf32> -> vector<10x16x24xf32>
    %61 = arith.truncf %60 : vector<10x16x24xf32> to vector<10x16x24xbf16>
    %62 = vector.shape_cast %61 : vector<10x16x24xbf16> to vector<160x24xbf16>
    %63 = vector.extract_strided_slice %62 {offsets = [0, 0], sizes = [128, 24], strides = [1, 1]} : vector<160x24xbf16> to vector<128x24xbf16>
    %c0_28 = arith.constant 0 : index
    %c0_29 = arith.constant 0 : index
    %c0_30 = arith.constant 0 : index
    %64 = vector.load %arg6[%c0_28, %c0_29, %c0_30] : memref<3x24x4xbf16, #tpu.memory_space<vmem>>, vector<1x24x4xbf16>
    %65 = vector.shape_cast %64 : vector<1x24x4xbf16> to vector<24x4xbf16>
    %cst_31 = arith.constant dense<0.000000e+00> : vector<128x4xf32>
    %66 = tpu.matmul %63, %65, %cst_31 {dimension_numbers = #tpu.dot_dimension_numbers<[1], [0], [0], [1], [0, 0, 1, 1], [], []>} : vector<128x24xbf16>, vector<24x4xbf16>, vector<128x4xf32> -> vector<128x4xf32>
    %67 = vector.extract_strided_slice %62 {offsets = [16, 0], sizes = [128, 24], strides = [1, 1]} : vector<160x24xbf16> to vector<128x24xbf16>
    %c1_32 = arith.constant 1 : index
    %c0_33 = arith.constant 0 : index
    %c0_34 = arith.constant 0 : index
    %68 = vector.load %arg6[%c1_32, %c0_33, %c0_34] : memref<3x24x4xbf16, #tpu.memory_space<vmem>>, vector<1x24x4xbf16>
    %69 = vector.shape_cast %68 : vector<1x24x4xbf16> to vector<24x4xbf16>
    %cst_35 = arith.constant dense<0.000000e+00> : vector<128x4xf32>
    %70 = tpu.matmul %67, %69, %cst_35 {dimension_numbers = #tpu.dot_dimension_numbers<[1], [0], [0], [1], [0, 0, 1, 1], [], []>} : vector<128x24xbf16>, vector<24x4xbf16>, vector<128x4xf32> -> vector<128x4xf32>
    %71 = arith.addf %66, %70 : vector<128x4xf32>
    %72 = vector.extract_strided_slice %62 {offsets = [32, 0], sizes = [128, 24], strides = [1, 1]} : vector<160x24xbf16> to vector<128x24xbf16>
    %c2_36 = arith.constant 2 : index
    %c0_37 = arith.constant 0 : index
    %c0_38 = arith.constant 0 : index
    %73 = vector.load %arg6[%c2_36, %c0_37, %c0_38] : memref<3x24x4xbf16, #tpu.memory_space<vmem>>, vector<1x24x4xbf16>
    %74 = vector.shape_cast %73 : vector<1x24x4xbf16> to vector<24x4xbf16>
    %cst_39 = arith.constant dense<0.000000e+00> : vector<128x4xf32>
    %75 = tpu.matmul %72, %74, %cst_39 {dimension_numbers = #tpu.dot_dimension_numbers<[1], [0], [0], [1], [0, 0, 1, 1], [], []>} : vector<128x24xbf16>, vector<24x4xbf16>, vector<128x4xf32> -> vector<128x4xf32>
    %76 = arith.addf %71, %75 : vector<128x4xf32>
    %cst_40 = arith.constant 0.000000e+00 : f32
    %77 = vector.broadcast %cst_40 : f32 to vector<128x4xf32>
    %78 = arith.maximumf %76, %77 : vector<128x4xf32>
    %79 = vector.shape_cast %78 : vector<128x4xf32> to vector<8x16x4xf32>
    %c0_41 = arith.constant 0 : index
    %c0_42 = arith.constant 0 : index
    %c0_43 = arith.constant 0 : index
    %c0_44 = arith.constant 0 : index
    %80 = vector.load %arg7[%c0_41, %c0_42, %c0_43, %c0_44] : memref<1x8x16x4xf32, #tpu.memory_space<vmem>>, vector<1x8x16x4xf32>
    %81 = vector.shape_cast %80 : vector<1x8x16x4xf32> to vector<8x16x4xf32>
    %82 = vector.shape_cast %79 : vector<8x16x4xf32> to vector<1x8x16x4xf32>
    tpu.vector_store %arg7[%c0_41, %c0_42, %c0_43, %c0_44], %82 {strides = array<i32>} : memref<1x8x16x4xf32, #tpu.memory_space<vmem>>, vector<1x8x16x4xf32>,
    return
  }
  func.func @transform_0(%arg0: i32, %arg1: i32) -> (i32, i32, i32, i32) {
    %c0_i32 = arith.constant 0 : i32
    %c0_i32_0 = arith.constant 0 : i32
    %c0_i32_1 = arith.constant 0 : i32
    return %arg0, %arg1, %c0_i32, %c0_i32_0 : i32, i32, i32, i32
  }
  func.func @transform_1(%arg0: i32, %arg1: i32) -> (i32, i32, i32, i32) {
    %c4_i32 = arith.constant 4 : i32
    %0 = arith.muli %arg1, %c4_i32 : i32
    %c1_i32 = arith.constant 1 : i32
    %1 = arith.subi %0, %c1_i32 : i32
    %c0_i32 = arith.constant 0 : i32
    %2 = arith.maxsi %1, %c0_i32 : i32
    %c0_i32_0 = arith.constant 0 : i32
    %c0_i32_1 = arith.constant 0 : i32
    %c0_i32_2 = arith.constant 0 : i32
    return %arg0, %2, %c0_i32_0, %c0_i32_1 : i32, i32, i32, i32
  }
  func.func @transform_2(%arg0: i32, %arg1: i32) -> (i32, i32, i32, i32) {
    %c1_i32 = arith.constant 1 : i32
    %0 = arith.addi %arg1, %c1_i32 : i32
    %c4_i32 = arith.constant 4 : i32
    %1 = arith.muli %0, %c4_i32 : i32
    %c7_i32 = arith.constant 7 : i32
    %2 = arith.minsi %1, %c7_i32 : i32
    %c0_i32 = arith.constant 0 : i32
    %c0_i32_0 = arith.constant 0 : i32
    %c0_i32_1 = arith.constant 0 : i32
    return %arg0, %2, %c0_i32, %c0_i32_0 : i32, i32, i32, i32
  }
  func.func @transform_3(%arg0: i32, %arg1: i32) -> (i32, i32, i32) {
    %c0_i32 = arith.constant 0 : i32
    %c0_i32_0 = arith.constant 0 : i32
    %c0_i32_1 = arith.constant 0 : i32
    %c0_i32_2 = arith.constant 0 : i32
    return %c0_i32, %c0_i32_0, %c0_i32_1 : i32, i32, i32
  }
  func.func @transform_4(%arg0: i32, %arg1: i32) -> (i32, i32, i32) {
    %c0_i32 = arith.constant 0 : i32
    %c0_i32_0 = arith.constant 0 : i32
    %c0_i32_1 = arith.constant 0 : i32
    %c0_i32_2 = arith.constant 0 : i32
    return %c0_i32, %c0_i32_0, %c0_i32_1 : i32, i32, i32
  }
  func.func @transform_5(%arg0: i32, %arg1: i32) -> (i32, i32, i32, i32) {
    %c0_i32 = arith.constant 0 : i32
    %c0_i32_0 = arith.constant 0 : i32
    %c0_i32_1 = arith.constant 0 : i32
    return %arg0, %arg1, %c0_i32, %c0_i32_0 : i32, i32, i32, i32
  }
}

</mosaic_0001>

<llo_original>
// kernel: tpu_custom_call.1
$region0: #{tpu_custom_call.1}
  #allocation0 [shape = 'u32[]', space=smem, size = 0x4, offset = 0x4, fixed_abs, tag = 'smem constant byte address 0x4 - core index']
  #allocation1 [shape = 'u32[144,128]{1,0:T(1,128)}', space=vmem, size = 0x12000, scoped, tag = 'internal scratch']
  %s0 = inlined_call_operand.vmem [shape: bf16[2,16,16,4], index: 0, kind: input, shape index: {}]
  %s1 = inlined_call_operand.vmem [shape: bf16[2,16,16,4], index: 1, kind: input, shape index: {}]
  %s2 = inlined_call_operand.vmem [shape: bf16[2,16,16,4], index: 2, kind: input, shape index: {}]
  %s3 = inlined_call_operand.vmem [shape: bf16[3,12,8], index: 3, kind: input, shape index: {}]
  %s4 = inlined_call_operand.vmem [shape: bf16[3,24,4], index: 4, kind: input, shape index: {}]
  %s5 = inlined_call_operand.vmem [shape: f32[2,16,16,4], index: 5, kind: output, shape index: {}]
  %s6 = sld [smem:[#allocation0]]
  $region53: #{tpu_custom_call.1} parent=0
    _
  %s8 = ssub.s32 1, %s6
  %s9 = scalar_select 0, %s8, %s6
  loop: start=0, step=1, limit=6
  $region2: #{tpu_custom_call.1} parent=0 // loop_pre_header
    _
  $region3: #{tpu_custom_call.1} parent=0 // loop_header
    %s11 = sphi 0, %s15
    %p12 = scmp.ge.s32.totalorder %s11, 6
    %s18 = sphi 0, %s30
    %s19 = sphi 0, %s26
    %s20 = sphi 0, %s18
    %s21 = sphi 0, %s19
    %s22 = sphi 0, %s20
    %s23 = sphi 0, %s21
    %s35 = sphi 0, %s37
    %s38 = sphi 0, %s35
    %s39 = sphi 0, %s38
    %s55 = sphi 0, %s39
    %s71 = sphi 0, %s73
    %s74 = sphi 0, %s71
    %s75 = sphi 0, %s74
    %s91 = sphi 0, %s75
    %s107 = sphi 0, %s109
    %s110 = sphi 0, %s107
    %s111 = sphi 0, %s110
    %s127 = sphi 0, %s111
    %s131 = sphi 0, %s131
    %s133 = sphi 0, %s131
    %s134 = sphi 0, %s133
    %s148 = sphi 0, %s134
    %s152 = sphi 0, %s152
    %s154 = sphi 0, %s152
    %s155 = sphi 0, %s154
    %s169 = sphi 0, %s155
    %s177 = sphi 0, %s179
    %s180 = sphi 0, %s177
    %s181 = sphi 0, %s180
    %s197 = sphi 0, %s181
  $region4: #{tpu_custom_call.1} parent=0 // loop_header_branch
    %14 = sbr.rel (%p12) target = $region8
  $region5: #{tpu_custom_call.1} parent=0 // loop_body
    %s16 = ssub.s32 %s11, 1
    %s17 = ssub.s32 %s11, 2
    %s24 = sadd.s32 1, %s19
    %p25 = scmp.ge.s32.totalorder %s24, 2
    %s26 = scalar_select %p25, 0, %s24
    %s27 = sadd.s32 1, %s18
    %s28 = scalar_select %p25, %s27, %s18
    %p29 = scmp.ge.s32.totalorder %s28, 2
    %s30 = scalar_select %p29, 0, %s28
    %s31 = ssub.s32 %s18, %s30
    %s32 = ssub.s32 %s19, %s26
    %s33 = sor.u32 %s31, %s32
    %p34 = scmp.eq.s32.totalorder %s33, 0
    %s36 = sadd.s32 %s35, 1
    %s37 = scalar_select %p34, %s35, %s36
    %p40 = pneg %p34
    %p41 = scmp.eq.s32.totalorder %s11, 3
    %p42 = por %p40, %p41
    %p43 = scmp.ne.s32.totalorder %s35, %s38
    %p44 = scmp.eq.s32.totalorder %s11, 0
    %p45 = por %p43, %p44
    %p46 = scmp.ne.s32.totalorder %s35, %s38
    %p47 = scmp.eq.s32.totalorder %s16, 3
    %p48 = por %p46, %p47
    %p49 = scmp.ne.s32.totalorder %s38, %s39
    %p50 = scmp.eq.s32.totalorder %s16, 0
    %p51 = por %p49, %p50
    %p52 = scmp.ne.s32.totalorder %s38, %s39
    %p53 = scmp.eq.s32.totalorder %s17, 3
    %p54 = por %p52, %p53
    %p56 = scmp.ne.s32.totalorder %s39, %s55
    %p57 = scmp.eq.s32.totalorder %s17, 0
    %p58 = por %p56, %p57
    %s59 = smul.u32 %s19, 4
    %s60 = ssub.s32 %s59, 1
    %p61 = scmp.gt.s32.totalorder %s60, 0
    %s62 = scalar_select %p61, %s60, 0
    %s63 = smul.u32 %s26, 4
    %s64 = ssub.s32 %s63, 1
    %p65 = scmp.gt.s32.totalorder %s64, 0
    %s66 = scalar_select %p65, %s64, 0
    %s67 = ssub.s32 %s18, %s30
    %s68 = ssub.s32 %s62, %s66
    %s69 = sor.u32 %s67, %s68
    %p70 = scmp.eq.s32.totalorder %s69, 0
    %s72 = sadd.s32 %s71, 1
    %s73 = scalar_select %p70, %s71, %s72
    %p76 = pneg %p70
    %p77 = scmp.eq.s32.totalorder %s11, 3
    %p78 = por %p76, %p77
    %p79 = scmp.ne.s32.totalorder %s71, %s74
    %p80 = scmp.eq.s32.totalorder %s11, 0
    %p81 = por %p79, %p80
    %p82 = scmp.ne.s32.totalorder %s71, %s74
    %p83 = scmp.eq.s32.totalorder %s16, 3
    %p84 = por %p82, %p83
    %p85 = scmp.ne.s32.totalorder %s74, %s75
    %p86 = scmp.eq.s32.totalorder %s16, 0
    %p87 = por %p85, %p86
    %p88 = scmp.ne.s32.totalorder %s74, %s75
    %p89 = scmp.eq.s32.totalorder %s17, 3
    %p90 = por %p88, %p89
    %p92 = scmp.ne.s32.totalorder %s75, %s91
    %p93 = scmp.eq.s32.totalorder %s17, 0
    %p94 = por %p92, %p93
    %s95 = sadd.s32 %s19, 1
    %s96 = smul.u32 %s95, 4
    %p97 = scmp.lt.s32.totalorder %s96, 7
    %s98 = scalar_select %p97, %s96, 7
    %s99 = sadd.s32 %s26, 1
    %s100 = smul.u32 %s99, 4
    %p101 = scmp.lt.s32.totalorder %s100, 7
    %s102 = scalar_select %p101, %s100, 7
    %s103 = ssub.s32 %s18, %s30
    %s104 = ssub.s32 %s98, %s102
    %s105 = sor.u32 %s103, %s104
    %p106 = scmp.eq.s32.totalorder %s105, 0
    %s108 = sadd.s32 %s107, 1
    %s109 = scalar_select %p106, %s107, %s108
    %p112 = pneg %p106
    %p113 = scmp.eq.s32.totalorder %s11, 3
    %p114 = por %p112, %p113
    %p115 = scmp.ne.s32.totalorder %s107, %s110
    %p116 = scmp.eq.s32.totalorder %s11, 0
    %p117 = por %p115, %p116
    %p118 = scmp.ne.s32.totalorder %s107, %s110
    %p119 = scmp.eq.s32.totalorder %s16, 3
    %p120 = por %p118, %p119
    %p121 = scmp.ne.s32.totalorder %s110, %s111
    %p122 = scmp.eq.s32.totalorder %s16, 0
    %p123 = por %p121, %p122
    %p124 = scmp.ne.s32.totalorder %s110, %s111
    %p125 = scmp.eq.s32.totalorder %s17, 3
    %p126 = por %p124, %p125
    %p128 = scmp.ne.s32.totalorder %s111, %s127
    %p129 = scmp.eq.s32.totalorder %s17, 0
    %p130 = por %p128, %p129
    %s132 = sadd.s32 %s131, 1
    %p135 = scmp.eq.s32.totalorder %s11, 3
    %p136 = scmp.ne.s32.totalorder %s131, %s133
    %p137 = scmp.eq.s32.totalorder %s11, 0
    %p138 = por %p136, %p137
    %p139 = scmp.ne.s32.totalorder %s131, %s133
    %p140 = scmp.eq.s32.totalorder %s16, 3
    %p141 = por %p139, %p140
    %p142 = scmp.ne.s32.totalorder %s133, %s134
    %p143 = scmp.eq.s32.totalorder %s16, 0
    %p144 = por %p142, %p143
    %p145 = scmp.ne.s32.totalorder %s133, %s134
    %p146 = scmp.eq.s32.totalorder %s17, 3
    %p147 = por %p145, %p146
    %p149 = scmp.ne.s32.totalorder %s134, %s148
    %p150 = scmp.eq.s32.totalorder %s17, 0
    %p151 = por %p149, %p150
    %s153 = sadd.s32 %s152, 1
    %p156 = scmp.eq.s32.totalorder %s11, 3
    %p157 = scmp.ne.s32.totalorder %s152, %s154
    %p158 = scmp.eq.s32.totalorder %s11, 0
    %p159 = por %p157, %p158
    %p160 = scmp.ne.s32.totalorder %s152, %s154
    %p161 = scmp.eq.s32.totalorder %s16, 3
    %p162 = por %p160, %p161
    %p163 = scmp.ne.s32.totalorder %s154, %s155
    %p164 = scmp.eq.s32.totalorder %s16, 0
    %p165 = por %p163, %p164
    %p166 = scmp.ne.s32.totalorder %s154, %s155
    %p167 = scmp.eq.s32.totalorder %s17, 3
    %p168 = por %p166, %p167
    %p170 = scmp.ne.s32.totalorder %s155, %s169
    %p171 = scmp.eq.s32.totalorder %s17, 0
    %p172 = por %p170, %p171
    %s173 = ssub.s32 %s18, %s30
    %s174 = ssub.s32 %s19, %s26
    %s175 = sor.u32 %s173, %s174
    %p176 = scmp.eq.s32.totalorder %s175, 0
    %s178 = sadd.s32 %s177, 1
    %s179 = scalar_select %p176, %s177, %s178
    %p182 = pneg %p176
    %p183 = scmp.eq.s32.totalorder %s11, 3
    %p184 = por %p182, %p183
    %p185 = scmp.ne.s32.totalorder %s177, %s180
    %p186 = scmp.eq.s32.totalorder %s11, 0
    %p187 = por %p185, %p186
    %p188 = scmp.ne.s32.totalorder %s177, %s180
    %p189 = scmp.eq.s32.totalorder %s16, 3
    %p190 = por %p188, %p189
    %p191 = scmp.ne.s32.totalorder %s180, %s181
    %p192 = scmp.eq.s32.totalorder %s16, 0
    %p193 = por %p191, %p192
    %p194 = scmp.ne.s32.totalorder %s180, %s181
    %p195 = scmp.eq.s32.totalorder %s17, 3
    %p196 = por %p194, %p195
    %p198 = scmp.ne.s32.totalorder %s181, %s197
    %p199 = scmp.eq.s32.totalorder %s17, 0
    %p200 = por %p198, %p199
    %p201 = scmp.le.s32.totalorder 1, %s11
    %p202 = scmp.lt.s32.totalorder %s11, 5
    %p203 = pnand %p201, %p202
    %p204 = pneg %p203
    // Predicated region
    $region9: #{tpu_custom_call.1} parent=5 // pred_check
      _
    $region10: #{tpu_custom_call.1} parent=5 // pred_check_branch
      %206 = sbr.rel (%p203) target = $region12
    $region11: #{tpu_custom_call.1} parent=5 // pred_region
      %s207 = ssub.s32 %s11, 1
      // Predicated region
      $region13: #{tpu_custom_call.1} parent=11 // pred_check
        %p208 = pneg %p144
      $region14: #{tpu_custom_call.1} parent=11 // pred_check_branch
        %210 = sbr.rel (%p208) target = $region16
      $region15: #{tpu_custom_call.1} parent=11 // pred_region
        _
      $region16: #{tpu_custom_call.1} parent=11 // pred_fallthru
        _
      // Predicated region
      $region17: #{tpu_custom_call.1} parent=11 // pred_check
        %p211 = pneg %p165
      $region18: #{tpu_custom_call.1} parent=11 // pred_check_branch
        %213 = sbr.rel (%p211) target = $region20
      $region19: #{tpu_custom_call.1} parent=11 // pred_region
        _
      $region20: #{tpu_custom_call.1} parent=11 // pred_fallthru
        _
    $region12: #{tpu_custom_call.1} parent=5 // pred_fallthru
      _
    %p214 = scmp.lt.s32.totalorder %s11, 4
    // Predicated region
    $region21: #{tpu_custom_call.1} parent=5 // pred_check
      %p215 = pneg %p214
    $region22: #{tpu_custom_call.1} parent=5 // pred_check_branch
      %217 = sbr.rel (%p215) target = $region24
    $region23: #{tpu_custom_call.1} parent=5 // pred_region
      // Predicated region
      $region25: #{tpu_custom_call.1} parent=23 // pred_check
        %p218 = pneg %p45
      $region26: #{tpu_custom_call.1} parent=23 // pred_check_branch
        %220 = sbr.rel (%p218) target = $region28
      $region27: #{tpu_custom_call.1} parent=23 // pred_region
        %s221 = smul.u32 8, %s19
        %p222 = scmp.lt.s32.totalorder %s18, 1
        %s223 = scalar_select %p222, %s18, 1
        %p224 = scmp.lt.s32.totalorder %s221, 15
        %s225 = scalar_select %p224, %s221, 15
        %s226 = smul.addr %s225, 2
        %s227 = smul.addr %s223, 32
        %s228 = sadd.s32 %s226, %s227
        %s229 = smul.addr %s228, 4
        %s230 = scalar_lea.vmem %s0, %s229
        %s231 = smul.u32 8, %s19
      $region28: #{tpu_custom_call.1} parent=23 // pred_fallthru
        _
      // Predicated region
      $region29: #{tpu_custom_call.1} parent=23 // pred_check
        %p232 = pneg %p81
      $region30: #{tpu_custom_call.1} parent=23 // pred_check_branch
        %234 = sbr.rel (%p232) target = $region32
      $region31: #{tpu_custom_call.1} parent=23 // pred_region
        %s235 = smul.u32 %s19, 4
        %s236 = ssub.s32 %s235, 1
        %p237 = scmp.gt.s32.totalorder %s236, 0
        %s238 = scalar_select %p237, %s236, 0
        %s239 = smul.u32 2, %s238
        %p240 = scmp.lt.s32.totalorder %s18, 1
        %s241 = scalar_select %p240, %s18, 1
        %p242 = scmp.lt.s32.totalorder %s239, 15
        %s243 = scalar_select %p242, %s239, 15
        %s244 = smul.addr %s243, 2
        %s245 = smul.addr %s241, 32
        %s246 = sadd.s32 %s244, %s245
        %s247 = smul.addr %s246, 4
        %s248 = scalar_lea.vmem %s1, %s247
        %s249 = smul.u32 %s19, 4
        %s250 = ssub.s32 %s249, 1
        %p251 = scmp.gt.s32.totalorder %s250, 0
        %s252 = scalar_select %p251, %s250, 0
        %s253 = smul.u32 2, %s252
      $region32: #{tpu_custom_call.1} parent=23 // pred_fallthru
        _
      // Predicated region
      $region33: #{tpu_custom_call.1} parent=23 // pred_check
        %p254 = pneg %p117
      $region34: #{tpu_custom_call.1} parent=23 // pred_check_branch
        %256 = sbr.rel (%p254) target = $region36
      $region35: #{tpu_custom_call.1} parent=23 // pred_region
        %s257 = sadd.s32 %s19, 1
        %s258 = smul.u32 %s257, 4
        %p259 = scmp.lt.s32.totalorder %s258, 7
        %s260 = scalar_select %p259, %s258, 7
        %s261 = smul.u32 2, %s260
        %p262 = scmp.lt.s32.totalorder %s18, 1
        %s263 = scalar_select %p262, %s18, 1
        %p264 = scmp.lt.s32.totalorder %s261, 15
        %s265 = scalar_select %p264, %s261, 15
        %s266 = smul.addr %s265, 2
        %s267 = smul.addr %s263, 32
        %s268 = sadd.s32 %s266, %s267
        %s269 = smul.addr %s268, 4
        %s270 = scalar_lea.vmem %s2, %s269
        %s271 = sadd.s32 %s19, 1
        %s272 = smul.u32 %s271, 4
        %p273 = scmp.lt.s32.totalorder %s272, 7
        %s274 = scalar_select %p273, %s272, 7
        %s275 = smul.u32 2, %s274
      $region36: #{tpu_custom_call.1} parent=23 // pred_fallthru
        _
    $region24: #{tpu_custom_call.1} parent=5 // pred_fallthru
      _
    %p276 = scmp.le.s32.totalorder 1, %s11
    %p277 = scmp.lt.s32.totalorder %s11, 5
    %p278 = pnand %p276, %p277
    %p279 = pneg %p278
    // Predicated region
    $region37: #{tpu_custom_call.1} parent=5 // pred_check
      _
    $region38: #{tpu_custom_call.1} parent=5 // pred_check_branch
      %281 = sbr.rel (%p278) target = $region40
    $region39: #{tpu_custom_call.1} parent=5 // pred_region
      %s282 = ssub.s32 %s11, 1
      %s283 = smul.u32 8, %s21
      %p284 = scmp.lt.s32.totalorder %s20, 1
      %s285 = scalar_select %p284, %s20, 1
      %p286 = scmp.lt.s32.totalorder %s283, 15
      %s287 = scalar_select %p286, %s283, 15
      %s288 = smul.addr %s287, 2
      %s289 = smul.addr %s285, 32
      %s290 = sadd.s32 %s288, %s289
      %s291 = smul.addr %s290, 4
      %s292 = scalar_lea.vmem %s0, %s291
      %p293 = pneg %p51
      %p294 = pneg %p48
      %s295 = smul.u32 %s21, 4
      %s296 = ssub.s32 %s295, 1
      %p297 = scmp.gt.s32.totalorder %s296, 0
      %s298 = scalar_select %p297, %s296, 0
      %s299 = smul.u32 2, %s298
      %p300 = scmp.lt.s32.totalorder %s20, 1
      %s301 = scalar_select %p300, %s20, 1
      %p302 = scmp.lt.s32.totalorder %s299, 15
      %s303 = scalar_select %p302, %s299, 15
      %s304 = smul.addr %s303, 2
      %s305 = smul.addr %s301, 32
      %s306 = sadd.s32 %s304, %s305
      %s307 = smul.addr %s306, 4
      %s308 = scalar_lea.vmem %s1, %s307
      %p309 = pneg %p87
      %p310 = pneg %p84
      %s311 = sadd.s32 %s21, 1
      %s312 = smul.u32 %s311, 4
      %p313 = scmp.lt.s32.totalorder %s312, 7
      %s314 = scalar_select %p313, %s312, 7
      %s315 = smul.u32 2, %s314
      %p316 = scmp.lt.s32.totalorder %s20, 1
      %s317 = scalar_select %p316, %s20, 1
      %p318 = scmp.lt.s32.totalorder %s315, 15
      %s319 = scalar_select %p318, %s315, 15
      %s320 = smul.addr %s319, 2
      %s321 = smul.addr %s317, 32
      %s322 = sadd.s32 %s320, %s321
      %s323 = smul.addr %s322, 4
      %s324 = scalar_lea.vmem %s2, %s323
      %p325 = pneg %p123
      %p326 = pneg %p120
      %p327 = pneg %p144
      %p328 = pneg %p141
      %p329 = pneg %p165
      %p330 = pneg %p162
      %p331 = pneg %p193
      %p332 = pneg %p190
      %s333 = smul.u32 8, %s21
      %p334 = scmp.lt.s32.totalorder %s20, 1
      %s335 = scalar_select %p334, %s20, 1
      %p336 = scmp.lt.s32.totalorder %s333, 15
      %s337 = scalar_select %p336, %s333, 15
      %s338 = smul.addr %s337, 2
      %s339 = smul.addr %s335, 32
      %s340 = sadd.s32 %s338, %s339
      %s341 = smul.addr %s340, 8
      %s342 = scalar_lea.vmem %s5, %s341
      %s343 = smul.u32 8, %s21
      %p344 = scmp.lt.s32.totalorder %s20, 1
      %s345 = scalar_select %p344, %s20, 1
      %p346 = scmp.lt.s32.totalorder %s343, 15
      %s347 = scalar_select %p346, %s343, 15
      %s348 = smul.addr %s347, 2
      %s349 = smul.addr %s345, 32
      %s350 = sadd.s32 %s348, %s349
      %s351 = smul.addr %s350, 4
      %s352 = scalar_lea.vmem %s0, %s351
      %s353 = smul.u32 8, %s21
      %s354 = smul.u32 %s21, 4
      %s355 = ssub.s32 %s354, 1
      %p356 = scmp.gt.s32.totalorder %s355, 0
      %s357 = scalar_select %p356, %s355, 0
      %s358 = smul.u32 2, %s357
      %p359 = scmp.lt.s32.totalorder %s20, 1
      %s360 = scalar_select %p359, %s20, 1
      %p361 = scmp.lt.s32.totalorder %s358, 15
      %s362 = scalar_select %p361, %s358, 15
      %s363 = smul.addr %s362, 2
      %s364 = smul.addr %s360, 32
      %s365 = sadd.s32 %s363, %s364
      %s366 = smul.addr %s365, 4
      %s367 = scalar_lea.vmem %s1, %s366
      %s368 = smul.u32 %s21, 4
      %s369 = ssub.s32 %s368, 1
      %p370 = scmp.gt.s32.totalorder %s369, 0
      %s371 = scalar_select %p370, %s369, 0
      %s372 = smul.u32 2, %s371
      %s373 = sadd.s32 %s21, 1
      %s374 = smul.u32 %s373, 4
      %p375 = scmp.lt.s32.totalorder %s374, 7
      %s376 = scalar_select %p375, %s374, 7
      %s377 = smul.u32 2, %s376
      %p378 = scmp.lt.s32.totalorder %s20, 1
      %s379 = scalar_select %p378, %s20, 1
      %p380 = scmp.lt.s32.totalorder %s377, 15
      %s381 = scalar_select %p380, %s377, 15
      %s382 = smul.addr %s381, 2
      %s383 = smul.addr %s379, 32
      %s384 = sadd.s32 %s382, %s383
      %s385 = smul.addr %s384, 4
      %s386 = scalar_lea.vmem %s2, %s385
      %s387 = sadd.s32 %s21, 1
      %s388 = smul.u32 %s387, 4
      %p389 = scmp.lt.s32.totalorder %s388, 7
      %s390 = scalar_select %p389, %s388, 7
      %s391 = smul.u32 2, %s390
      %s392 = smul.u32 8, %s21
      %p393 = scmp.lt.s32.totalorder %s20, 1
      %s394 = scalar_select %p393, %s20, 1
      %p395 = scmp.lt.s32.totalorder %s392, 15
      %s396 = scalar_select %p395, %s392, 15
      %s397 = smul.addr %s396, 2
      %s398 = smul.addr %s394, 32
      %s399 = sadd.s32 %s397, %s398
      %s400 = smul.addr %s399, 8
      %s401 = scalar_lea.vmem %s5, %s400
      %s402 = smul.u32 8, %s21
      %p404 = scmp.gt.s32.totalorder %s21, 0
      %v405 = vld [vmem:[%s367] sm:$0xf]
      %v406 = vld [vmem:[%s367 + $0x4] sm:$0xf]
      %v407 = vld [vmem:[%s367 + $0x8] sm:$0xf]
      %v408 = vld [vmem:[%s367 + $0xc] sm:$0xf]
      %s409 = scalar_select %p404, 1, 0
      %v410 = vstv %s409
      %vm411 = vcmp.eq.s32.totalorder %v410, 1
      %v412 = vsel %vm411, %v405, 0
      %v413 = vsel %vm411, %v406, 0
      %v414 = vsel %vm411, %v407, 0
      %v415 = vsel %vm411, %v408, 0
      %p416 = scmp.lt.s32.totalorder %s21, 1
      %v417 = vld [vmem:[%s386] sm:$0xf]
      %v418 = vld [vmem:[%s386 + $0x4] sm:$0xf]
      %v419 = vld [vmem:[%s386 + $0x8] sm:$0xf]
      %v420 = vld [vmem:[%s386 + $0xc] sm:$0xf]
      %s421 = scalar_select %p416, 1, 0
      %v422 = vstv %s421
      %vm423 = vcmp.eq.s32.totalorder %v422, 1
      %v424 = vsel %vm423, %v417, 0
      %v425 = vsel %vm423, %v418, 0
      %v426 = vsel %vm423, %v419, 0
      %v427 = vsel %vm423, %v420, 0
      %v428 = vld [vmem:[%s352] sm:$0xf]
      %v429 = vld [vmem:[%s352 + $0x4] sm:$0xf]
      %v430 = vld [vmem:[%s352 + $0x8] sm:$0xf]
      %v431 = vld [vmem:[%s352 + $0xc] sm:$0xf]
      %v432 = vld [vmem:[%s352 + $0x10] sm:$0xf]
      %v433 = vld [vmem:[%s352 + $0x14] sm:$0xf]
      %v434 = vld [vmem:[%s352 + $0x18] sm:$0xf]
      %v435 = vld [vmem:[%s352 + $0x1c] sm:$0xf]
      %v436 = vld [vmem:[%s352 + $0x20] sm:$0xf]
      %v437 = vld [vmem:[%s352 + $0x24] sm:$0xf]
      %v438 = vld [vmem:[%s352 + $0x28] sm:$0xf]
      %v439 = vld [vmem:[%s352 + $0x2c] sm:$0xf]
      %v440 = vld [vmem:[%s352 + $0x30] sm:$0xf]
      %v441 = vld [vmem:[%s352 + $0x34] sm:$0xf]
      %v442 = vld [vmem:[%s352 + $0x38] sm:$0xf]
      %v443 = vld [vmem:[%s352 + $0x3c] sm:$0xf]
      %v444 = vunpack.c.l.bf16 %v412
      %v445 = vunpack.c.l.bf16 %v413
      %v446 = vunpack.c.l.bf16 %v414
      %v447 = vunpack.c.l.bf16 %v415
      %v448 = vunpack.c.l.bf16 %v428
      %v449 = vunpack.c.l.bf16 %v429
      %v450 = vunpack.c.l.bf16 %v430
      %v451 = vunpack.c.l.bf16 %v431
      %v452 = vunpack.c.l.bf16 %v432
      %v453 = vunpack.c.l.bf16 %v433
      %v454 = vunpack.c.l.bf16 %v434
      %v455 = vunpack.c.l.bf16 %v435
      %v456 = vunpack.c.l.bf16 %v436
      %v457 = vunpack.c.l.bf16 %v437
      %v458 = vunpack.c.l.bf16 %v438
      %v459 = vunpack.c.l.bf16 %v439
      %v460 = vunpack.c.l.bf16 %v440
      %v461 = vunpack.c.l.bf16 %v441
      %v462 = vunpack.c.l.bf16 %v442
      %v463 = vunpack.c.l.bf16 %v443
      %v464 = vunpack.c.l.bf16 %v424
      %v465 = vunpack.c.l.bf16 %v425
      %v466 = vunpack.c.l.bf16 %v426
      %v467 = vunpack.c.l.bf16 %v427
      %vm492 = vcmask 1040384
      %v493 = vrot.slane %v444, 7
      %v494 = vrot.slane %v445, 7
      %v495 = vsel %vm492, %v493, %v494
      %v496 = vrot.slane %v446, 7
      %v497 = vrot.slane %v447, 7
      %v498 = vsel %vm492, %v496, %v497
      %v499 = vrot.slane %v448, 7
      %v500 = vrot.slane %v449, 7
      %v501 = vsel %vm492, %v499, %v500
      %v502 = vrot.slane %v450, 7
      %v503 = vrot.slane %v451, 7
      %v504 = vsel %vm492, %v502, %v503
      %v505 = vrot.slane %v452, 7
      %v506 = vrot.slane %v453, 7
      %v507 = vsel %vm492, %v505, %v506
      %v508 = vrot.slane %v454, 7
      %v509 = vrot.slane %v455, 7
      %v510 = vsel %vm492, %v508, %v509
      %v511 = vrot.slane %v456, 7
      %v512 = vrot.slane %v457, 7
      %v513 = vsel %vm492, %v511, %v512
      %v514 = vrot.slane %v458, 7
      %v515 = vrot.slane %v459, 7
      %v516 = vsel %vm492, %v514, %v515
      %v517 = vrot.slane %v460, 7
      %v518 = vrot.slane %v461, 7
      %v519 = vsel %vm492, %v517, %v518
      %v520 = vrot.slane %v462, 7
      %v521 = vrot.slane %v463, 7
      %v522 = vsel %vm492, %v520, %v521
      %v523 = vrot.slane %v464, 7
      %v524 = vrot.slane %v465, 7
      %v525 = vsel %vm492, %v523, %v524
      %v526 = vrot.slane %v466, 7
      %v527 = vrot.slane %v467, 7
      %v528 = vsel %vm492, %v526, %v527
      %v553 = vsel %vm492, 0.0, %v493
      %v554 = vsel %vm492, 0.0, %v496
      %v555 = vsel %vm492, 0.0, %v499
      %v556 = vsel %vm492, 0.0, %v502
      %v557 = vsel %vm492, 0.0, %v505
      %v558 = vsel %vm492, 0.0, %v508
      %v559 = vsel %vm492, 0.0, %v511
      %v560 = vsel %vm492, 0.0, %v514
      %v561 = vsel %vm492, 0.0, %v517
      %v562 = vsel %vm492, 0.0, %v520
      %v563 = vsel %vm492, 0.0, %v523
      %v564 = vsel %vm492, 0.0, %v526
      %vm565 = vcmask 1046528
      %v566 = vrot.slane %v444, 1
      %v567 = vrot.slane %v445, 1
      %v568 = vsel %vm565, %v566, %v567
      %v569 = vrot.slane %v446, 1
      %v570 = vrot.slane %v447, 1
      %v571 = vsel %vm565, %v569, %v570
      %v572 = vrot.slane %v448, 1
      %v573 = vrot.slane %v449, 1
      %v574 = vsel %vm565, %v572, %v573
      %v575 = vrot.slane %v450, 1
      %v576 = vrot.slane %v451, 1
      %v577 = vsel %vm565, %v575, %v576
      %v578 = vrot.slane %v452, 1
      %v579 = vrot.slane %v453, 1
      %v580 = vsel %vm565, %v578, %v579
      %v581 = vrot.slane %v454, 1
      %v582 = vrot.slane %v455, 1
      %v583 = vsel %vm565, %v581, %v582
      %v584 = vrot.slane %v456, 1
      %v585 = vrot.slane %v457, 1
      %v586 = vsel %vm565, %v584, %v585
      %v587 = vrot.slane %v458, 1
      %v588 = vrot.slane %v459, 1
      %v589 = vsel %vm565, %v587, %v588
      %v590 = vrot.slane %v460, 1
      %v591 = vrot.slane %v461, 1
      %v592 = vsel %vm565, %v590, %v591
      %v593 = vrot.slane %v462, 1
      %v594 = vrot.slane %v463, 1
      %v595 = vsel %vm565, %v593, %v594
      %v596 = vrot.slane %v464, 1
      %v597 = vrot.slane %v465, 1
      %v598 = vsel %vm565, %v596, %v597
      %v599 = vrot.slane %v466, 1
      %v600 = vrot.slane %v467, 1
      %v601 = vsel %vm565, %v599, %v600
      %v614 = vsel %vm565, %v567, 0.0
      %v615 = vsel %vm565, %v570, 0.0
      %v616 = vsel %vm565, %v573, 0.0
      %v617 = vsel %vm565, %v576, 0.0
      %v618 = vsel %vm565, %v579, 0.0
      %v619 = vsel %vm565, %v582, 0.0
      %v620 = vsel %vm565, %v585, 0.0
      %v621 = vsel %vm565, %v588, 0.0
      %v622 = vsel %vm565, %v591, 0.0
      %v623 = vsel %vm565, %v594, 0.0
      %v624 = vsel %vm565, %v597, 0.0
      %v625 = vsel %vm565, %v600, 0.0
      %626 = vrot.lane.b32.xlu0 %v444, 4
      %v627 = vpop.permute.xlu0 %626
      %628 = vrot.lane.b32.xlu0 %v445, 4
      %v629 = vpop.permute.xlu0 %628
      %630 = vrot.lane.b32.xlu0 %v446, 4
      %v631 = vpop.permute.xlu0 %630
      %632 = vrot.lane.b32.xlu0 %v447, 4
      %v633 = vpop.permute.xlu0 %632
      %634 = vrot.lane.b32.xlu0 %v448, 4
      %v635 = vpop.permute.xlu0 %634
      %636 = vrot.lane.b32.xlu0 %v449, 4
      %v637 = vpop.permute.xlu0 %636
      %638 = vrot.lane.b32.xlu0 %v450, 4
      %v639 = vpop.permute.xlu0 %638
      %640 = vrot.lane.b32.xlu0 %v451, 4
      %v641 = vpop.permute.xlu0 %640
      %642 = vrot.lane.b32.xlu0 %v452, 4
      %v643 = vpop.permute.xlu0 %642
      %644 = vrot.lane.b32.xlu0 %v453, 4
      %v645 = vpop.permute.xlu0 %644
      %646 = vrot.lane.b32.xlu0 %v454, 4
      %v647 = vpop.permute.xlu0 %646
      %648 = vrot.lane.b32.xlu0 %v455, 4
      %v649 = vpop.permute.xlu0 %648
      %650 = vrot.lane.b32.xlu0 %v456, 4
      %v651 = vpop.permute.xlu0 %650
      %652 = vrot.lane.b32.xlu0 %v457, 4
      %v653 = vpop.permute.xlu0 %652
      %654 = vrot.lane.b32.xlu0 %v458, 4
      %v655 = vpop.permute.xlu0 %654
      %656 = vrot.lane.b32.xlu0 %v459, 4
      %v657 = vpop.permute.xlu0 %656
      %658 = vrot.lane.b32.xlu0 %v460, 4
      %v659 = vpop.permute.xlu0 %658
      %660 = vrot.lane.b32.xlu0 %v461, 4
      %v661 = vpop.permute.xlu0 %660
      %662 = vrot.lane.b32.xlu0 %v462, 4
      %v663 = vpop.permute.xlu0 %662
      %664 = vrot.lane.b32.xlu0 %v463, 4
      %v665 = vpop.permute.xlu0 %664
      %666 = vrot.lane.b32.xlu0 %v464, 4
      %v667 = vpop.permute.xlu0 %666
      %668 = vrot.lane.b32.xlu0 %v465, 4
      %v669 = vpop.permute.xlu0 %668
      %670 = vrot.lane.b32.xlu0 %v466, 4
      %v671 = vpop.permute.xlu0 %670
      %672 = vrot.lane.b32.xlu0 %v467, 4
      %v673 = vpop.permute.xlu0 %672
      %710 = vrot.lane.b32.xlu0 %v568, 8
      %v711 = vpop.permute.xlu0 %710
      %712 = vrot.lane.b32.xlu0 %v614, 8
      %v713 = vpop.permute.xlu0 %712
      %714 = vrot.lane.b32.xlu0 %v571, 8
      %v715 = vpop.permute.xlu0 %714
      %716 = vrot.lane.b32.xlu0 %v615, 8
      %v717 = vpop.permute.xlu0 %716
      %718 = vrot.lane.b32.xlu0 %v574, 8
      %v719 = vpop.permute.xlu0 %718
      %720 = vrot.lane.b32.xlu0 %v616, 8
      %v721 = vpop.permute.xlu0 %720
      %722 = vrot.lane.b32.xlu0 %v577, 8
      %v723 = vpop.permute.xlu0 %722
      %724 = vrot.lane.b32.xlu0 %v617, 8
      %v725 = vpop.permute.xlu0 %724
      %726 = vrot.lane.b32.xlu0 %v580, 8
      %v727 = vpop.permute.xlu0 %726
      %728 = vrot.lane.b32.xlu0 %v618, 8
      %v729 = vpop.permute.xlu0 %728
      %730 = vrot.lane.b32.xlu0 %v583, 8
      %v731 = vpop.permute.xlu0 %730
      %732 = vrot.lane.b32.xlu0 %v619, 8
      %v733 = vpop.permute.xlu0 %732
      %734 = vrot.lane.b32.xlu0 %v586, 8
      %v735 = vpop.permute.xlu0 %734
      %736 = vrot.lane.b32.xlu0 %v620, 8
      %v737 = vpop.permute.xlu0 %736
      %738 = vrot.lane.b32.xlu0 %v589, 8
      %v739 = vpop.permute.xlu0 %738
      %740 = vrot.lane.b32.xlu0 %v621, 8
      %v741 = vpop.permute.xlu0 %740
      %742 = vrot.lane.b32.xlu0 %v592, 8
      %v743 = vpop.permute.xlu0 %742
      %744 = vrot.lane.b32.xlu0 %v622, 8
      %v745 = vpop.permute.xlu0 %744
      %746 = vrot.lane.b32.xlu0 %v595, 8
      %v747 = vpop.permute.xlu0 %746
      %748 = vrot.lane.b32.xlu0 %v623, 8
      %v749 = vpop.permute.xlu0 %748
      %750 = vrot.lane.b32.xlu0 %v598, 8
      %v751 = vpop.permute.xlu0 %750
      %752 = vrot.lane.b32.xlu0 %v624, 8
      %v753 = vpop.permute.xlu0 %752
      %754 = vrot.lane.b32.xlu0 %v601, 8
      %v755 = vpop.permute.xlu0 %754
      %756 = vrot.lane.b32.xlu0 %v625, 8
      %v757 = vpop.permute.xlu0 %756
      %vm782 = vcmask 31744
      %v783 = vsel %vm782, %v553, %v627
      %v784 = vsel %vm782, %v495, %v629
      %v785 = vsel %vm782, %v554, %v631
      %v786 = vsel %vm782, %v498, %v633
      %v787 = vsel %vm782, %v555, %v635
      %v788 = vsel %vm782, %v501, %v637
      %v789 = vsel %vm782, %v556, %v639
      %v790 = vsel %vm782, %v504, %v641
      %v791 = vsel %vm782, %v557, %v643
      %v792 = vsel %vm782, %v507, %v645
      %v793 = vsel %vm782, %v558, %v647
      %v794 = vsel %vm782, %v510, %v649
      %v795 = vsel %vm782, %v559, %v651
      %v796 = vsel %vm782, %v513, %v653
      %v797 = vsel %vm782, %v560, %v655
      %v798 = vsel %vm782, %v516, %v657
      %v799 = vsel %vm782, %v561, %v659
      %v800 = vsel %vm782, %v519, %v661
      %v801 = vsel %vm782, %v562, %v663
      %v802 = vsel %vm782, %v522, %v665
      %v803 = vsel %vm782, %v563, %v667
      %v804 = vsel %vm782, %v525, %v669
      %v805 = vsel %vm782, %v564, %v671
      %v806 = vsel %vm782, %v528, %v673
      %vm807 = vcmask 64512
      %v808 = vsel %vm807, %v783, %v711
      %v809 = vsel %vm807, %v784, %v713
      %v810 = vsel %vm807, %v785, %v715
      %v811 = vsel %vm807, %v786, %v717
      %v812 = vsel %vm807, %v787, %v719
      %v813 = vsel %vm807, %v788, %v721
      %v814 = vsel %vm807, %v789, %v723
      %v815 = vsel %vm807, %v790, %v725
      %v816 = vsel %vm807, %v791, %v727
      %v817 = vsel %vm807, %v792, %v729
      %v818 = vsel %vm807, %v793, %v731
      %v819 = vsel %vm807, %v794, %v733
      %v820 = vsel %vm807, %v795, %v735
      %v821 = vsel %vm807, %v796, %v737
      %v822 = vsel %vm807, %v797, %v739
      %v823 = vsel %vm807, %v798, %v741
      %v824 = vsel %vm807, %v799, %v743
      %v825 = vsel %vm807, %v800, %v745
      %v826 = vsel %vm807, %v801, %v747
      %v827 = vsel %vm807, %v802, %v749
      %v828 = vsel %vm807, %v803, %v751
      %v829 = vsel %vm807, %v804, %v753
      %v830 = vsel %vm807, %v805, %v755
      %v831 = vsel %vm807, %v806, %v757
      %v832 = vpack.c.bf16 %v809, %v808
      %v833 = vpack.c.bf16 %v811, %v810
      %v834 = vpack.c.bf16 %v813, %v812
      %v835 = vpack.c.bf16 %v815, %v814
      %v836 = vpack.c.bf16 %v817, %v816
      %v837 = vpack.c.bf16 %v819, %v818
      %v838 = vpack.c.bf16 %v821, %v820
      %v839 = vpack.c.bf16 %v823, %v822
      %v840 = vpack.c.bf16 %v825, %v824
      %v841 = vpack.c.bf16 %v827, %v826
      %v842 = vpack.c.bf16 %v829, %v828
      %v843 = vpack.c.bf16 %v831, %v830
      %v844 = vld [vmem:[%s3] sm:$0xf]
      %v845 = vld [vmem:[%s3 + $0x4] sm:$0x3]
      %s846 = scalar_lea.vmem %s3, 8
      %v847 = vld [vmem:[%s846] sm:$0xf]
      %v848 = vld [vmem:[%s846 + $0x4] sm:$0x3]
      %v851 = vunpack.c.l.b16 %v847
      %v852 = vunpack.c.l.b16 %v848
      %v853 = vpack.c.b16 %v852, %v851
      %vm854 = vcmask 97280
      %v856 = vsel %vm854, %v833, 0
      %v859 = vsel %vm854, %v834, 0
      %v862 = vsel %vm854, %v835, 0
      %v865 = vsel %vm854, %v836, 0
      %v868 = vsel %vm854, %v837, 0
      %v871 = vsel %vm854, %v838, 0
      %v874 = vsel %vm854, %v839, 0
      %v877 = vsel %vm854, %v840, 0
      %v880 = vsel %vm854, %v841, 0
      %v883 = vsel %vm854, %v842, 0
      %vm885 = vcmask 1045504
      %v887 = vsel %vm885, %v853, 0
      %889 = vmatprep.subr.bf16.mxu0 0
      %890 = vmatpush1.bf16.msra.mxu0 0
      %891 = vmatprep.subr.bf16.mxu0 0
      %892 = vmatpush1.bf16.msra.mxu0 0
      %893 = vmatprep.subr.bf16.mxu0 0
      %894 = vmatpush1.bf16.msra.mxu0 0
      %895 = vmatprep.subr.bf16.mxu0 0
      %896 = vmatpush1.bf16.msra.mxu0 0
      %897 = vmatprep.subr.bf16.mxu0 0
      %898 = vmatpush1.bf16.msra.mxu0 0
      %899 = vmatprep.subr.bf16.mxu0 0
      %900 = vmatpush1.bf16.msra.mxu0 0
      %901 = vmatprep.subr.bf16.mxu0 0
      %902 = vmatpush1.bf16.msra.mxu0 0
      %903 = vmatprep.subr.bf16.mxu0 0
      %904 = vmatpush1.bf16.msra.mxu0 %v887
      %905 = vmatprep.subr.bf16.mxu0 0
      %906 = vmatpush2.bf16.msra.mxu0 0
      %907 = vmatprep.subr.bf16.mxu0 0
      %908 = vmatpush2.bf16.msra.mxu0 0
      %909 = vmatprep.subr.bf16.mxu0 0
      %910 = vmatpush2.bf16.msra.mxu0 0
      %911 = vmatprep.subr.bf16.mxu0 0
      %912 = vmatpush2.bf16.msra.mxu0 0
      %913 = vmatprep.subr.bf16.mxu0 0
      %914 = vmatpush2.bf16.msra.mxu0 0
      %915 = vmatprep.subr.bf16.mxu0 0
      %916 = vmatpush2.bf16.msra.mxu0 0
      %917 = vmatprep.subr.bf16.mxu0 0
      %918 = vmatpush2.bf16.msra.mxu0 0
      %919 = vmatprep.subr.bf16.mxu0 0
      %920 = vmatpush2.bf16.msra.mxu0 0
      %921 = vmatprep.mubr.bf16.mxu0 0
      %922 = vmatmul.mubr.bf16.gmra.mxu0 %v856
      %v923 = vpop.f32.mrf.mxu0
      %v924 = vadd.f32 0.0, %v923
      %v925 = vpop.f32.mrf.mxu0
      %v926 = vpop.f32.mrf.mxu0
      %v927 = vadd.f32 0.0, %v926
      %v928 = vpop.f32.mrf.mxu0
      %929 = vmatprep.mubr.bf16.mxu0 0
      %930 = vmatmul.mubr.bf16.gmra.mxu0 %v859
      %v931 = vpop.f32.mrf.mxu0
      %v932 = vadd.f32 0.0, %v931
      %v933 = vpop.f32.mrf.mxu0
      %v934 = vpop.f32.mrf.mxu0
      %v935 = vadd.f32 0.0, %v934
      %v936 = vpop.f32.mrf.mxu0
      %937 = vmatprep.mubr.bf16.mxu0 0
      %938 = vmatmul.mubr.bf16.gmra.mxu0 %v862
      %v939 = vpop.f32.mrf.mxu0
      %v940 = vadd.f32 0.0, %v939
      %v941 = vpop.f32.mrf.mxu0
      %v942 = vpop.f32.mrf.mxu0
      %v943 = vadd.f32 0.0, %v942
      %v944 = vpop.f32.mrf.mxu0
      %945 = vmatprep.mubr.bf16.mxu0 0
      %946 = vmatmul.mubr.bf16.gmra.mxu0 %v865
      %v947 = vpop.f32.mrf.mxu0
      %v948 = vadd.f32 0.0, %v947
      %v949 = vpop.f32.mrf.mxu0
      %v950 = vpop.f32.mrf.mxu0
      %v951 = vadd.f32 0.0, %v950
      %v952 = vpop.f32.mrf.mxu0
      %953 = vmatprep.mubr.bf16.mxu0 0
      %954 = vmatmul.mubr.bf16.gmra.mxu0 %v868
      %v955 = vpop.f32.mrf.mxu0
      %v956 = vadd.f32 0.0, %v955
      %v957 = vpop.f32.mrf.mxu0
      %v958 = vpop.f32.mrf.mxu0
      %v959 = vadd.f32 0.0, %v958
      %v960 = vpop.f32.mrf.mxu0
      %961 = vmatprep.mubr.bf16.mxu0 0
      %962 = vmatmul.mubr.bf16.gmra.mxu0 %v871
      %v963 = vpop.f32.mrf.mxu0
      %v964 = vadd.f32 0.0, %v963
      %v965 = vpop.f32.mrf.mxu0
      %v966 = vpop.f32.mrf.mxu0
      %v967 = vadd.f32 0.0, %v966
      %v968 = vpop.f32.mrf.mxu0
      %969 = vmatprep.mubr.bf16.mxu0 0
      %970 = vmatmul.mubr.bf16.gmra.mxu0 %v874
      %v971 = vpop.f32.mrf.mxu0
      %v972 = vadd.f32 0.0, %v971
      %v973 = vpop.f32.mrf.mxu0
      %v974 = vpop.f32.mrf.mxu0
      %v975 = vadd.f32 0.0, %v974
      %v976 = vpop.f32.mrf.mxu0
      %977 = vmatprep.mubr.bf16.mxu0 0
      %978 = vmatmul.mubr.bf16.gmra.mxu0 %v877
      %v979 = vpop.f32.mrf.mxu0
      %v980 = vadd.f32 0.0, %v979
      %v981 = vpop.f32.mrf.mxu0
      %v982 = vpop.f32.mrf.mxu0
      %v983 = vadd.f32 0.0, %v982
      %v984 = vpop.f32.mrf.mxu0
      %985 = vmatprep.mubr.bf16.mxu0 0
      %986 = vmatmul.mubr.bf16.gmra.mxu0 %v880
      %v987 = vpop.f32.mrf.mxu0
      %v988 = vadd.f32 0.0, %v987
      %v989 = vpop.f32.mrf.mxu0
      %v990 = vpop.f32.mrf.mxu0
      %v991 = vadd.f32 0.0, %v990
      %v992 = vpop.f32.mrf.mxu0
      %993 = vmatprep.mubr.bf16.mxu0 0
      %994 = vmatmul.mubr.bf16.gmra.mxu0 %v883
      %v995 = vpop.f32.mrf.mxu0
      %v996 = vadd.f32 0.0, %v995
      %v997 = vpop.f32.mrf.mxu0
      %v998 = vpop.f32.mrf.mxu0
      %v999 = vadd.f32 0.0, %v998
      %v1000 = vpop.f32.mrf.mxu0
      %1001 = vdwg.mxu0
      %v1004 = vunpack.c.l.b16 %v844
      %v1005 = vunpack.c.l.b16 %v845
      %v1006 = vpack.c.b16 %v1005, %v1004
      %v1008 = vsel %vm854, %v832, 0
      %v1011 = vsel %vm885, %v1006, 0
      %1013 = vmatprep.subr.bf16.mxu0 0
      %1014 = vmatpush1.bf16.msra.mxu0 0
      %1015 = vmatprep.subr.bf16.mxu0 0
      %1016 = vmatpush1.bf16.msra.mxu0 0
      %1017 = vmatprep.subr.bf16.mxu0 0
      %1018 = vmatpush1.bf16.msra.mxu0 0
      %1019 = vmatprep.subr.bf16.mxu0 0
      %1020 = vmatpush1.bf16.msra.mxu0 0
      %1021 = vmatprep.subr.bf16.mxu0 0
      %1022 = vmatpush1.bf16.msra.mxu0 0
      %1023 = vmatprep.subr.bf16.mxu0 0
      %1024 = vmatpush1.bf16.msra.mxu0 0
      %1025 = vmatprep.subr.bf16.mxu0 0
      %1026 = vmatpush1.bf16.msra.mxu0 0
      %1027 = vmatprep.subr.bf16.mxu0 0
      %1028 = vmatpush1.bf16.msra.mxu0 %v1011
      %1029 = vmatprep.subr.bf16.mxu0 0
      %1030 = vmatpush2.bf16.msra.mxu0 0
      %1031 = vmatprep.subr.bf16.mxu0 0
      %1032 = vmatpush2.bf16.msra.mxu0 0
      %1033 = vmatprep.subr.bf16.mxu0 0
      %1034 = vmatpush2.bf16.msra.mxu0 0
      %1035 = vmatprep.subr.bf16.mxu0 0
      %1036 = vmatpush2.bf16.msra.mxu0 0
      %1037 = vmatprep.subr.bf16.mxu0 0
      %1038 = vmatpush2.bf16.msra.mxu0 0
      %1039 = vmatprep.subr.bf16.mxu0 0
      %1040 = vmatpush2.bf16.msra.mxu0 0
      %1041 = vmatprep.subr.bf16.mxu0 0
      %1042 = vmatpush2.bf16.msra.mxu0 0
      %1043 = vmatprep.subr.bf16.mxu0 0
      %1044 = vmatpush2.bf16.msra.mxu0 0
      %1045 = vmatprep.mubr.bf16.mxu0 0
      %1046 = vmatmul.mubr.bf16.gmra.mxu0 %v1008
      %v1047 = vpop.f32.mrf.mxu0
      %v1048 = vadd.f32 %v924, %v1047
      %v1049 = vpop.f32.mrf.mxu0
      %v1050 = vpop.f32.mrf.mxu0
      %v1051 = vadd.f32 %v927, %v1050
      %v1052 = vpop.f32.mrf.mxu0
      %1053 = vmatprep.mubr.bf16.mxu0 0
      %1054 = vmatmul.mubr.bf16.gmra.mxu0 %v856
      %v1055 = vpop.f32.mrf.mxu0
      %v1056 = vadd.f32 %v932, %v1055
      %v1057 = vpop.f32.mrf.mxu0
      %v1058 = vpop.f32.mrf.mxu0
      %v1059 = vadd.f32 %v935, %v1058
      %v1060 = vpop.f32.mrf.mxu0
      %1061 = vmatprep.mubr.bf16.mxu0 0
      %1062 = vmatmul.mubr.bf16.gmra.mxu0 %v859
      %v1063 = vpop.f32.mrf.mxu0
      %v1064 = vadd.f32 %v940, %v1063
      %v1065 = vpop.f32.mrf.mxu0
      %v1066 = vpop.f32.mrf.mxu0
      %v1067 = vadd.f32 %v943, %v1066
      %v1068 = vpop.f32.mrf.mxu0
      %1069 = vmatprep.mubr.bf16.mxu0 0
      %1070 = vmatmul.mubr.bf16.gmra.mxu0 %v862
      %v1071 = vpop.f32.mrf.mxu0
      %v1072 = vadd.f32 %v948, %v1071
      %v1073 = vpop.f32.mrf.mxu0
      %v1074 = vpop.f32.mrf.mxu0
      %v1075 = vadd.f32 %v951, %v1074
      %v1076 = vpop.f32.mrf.mxu0
      %1077 = vmatprep.mubr.bf16.mxu0 0
      %1078 = vmatmul.mubr.bf16.gmra.mxu0 %v865
      %v1079 = vpop.f32.mrf.mxu0
      %v1080 = vadd.f32 %v956, %v1079
      %v1081 = vpop.f32.mrf.mxu0
      %v1082 = vpop.f32.mrf.mxu0
      %v1083 = vadd.f32 %v959, %v1082
      %v1084 = vpop.f32.mrf.mxu0
      %1085 = vmatprep.mubr.bf16.mxu0 0
      %1086 = vmatmul.mubr.bf16.gmra.mxu0 %v868
      %v1087 = vpop.f32.mrf.mxu0
      %v1088 = vadd.f32 %v964, %v1087
      %v1089 = vpop.f32.mrf.mxu0
      %v1090 = vpop.f32.mrf.mxu0
      %v1091 = vadd.f32 %v967, %v1090
      %v1092 = vpop.f32.mrf.mxu0
      %1093 = vmatprep.mubr.bf16.mxu0 0
      %1094 = vmatmul.mubr.bf16.gmra.mxu0 %v871
      %v1095 = vpop.f32.mrf.mxu0
      %v1096 = vadd.f32 %v972, %v1095
      %v1097 = vpop.f32.mrf.mxu0
      %v1098 = vpop.f32.mrf.mxu0
      %v1099 = vadd.f32 %v975, %v1098
      %v1100 = vpop.f32.mrf.mxu0
      %1101 = vmatprep.mubr.bf16.mxu0 0
      %1102 = vmatmul.mubr.bf16.gmra.mxu0 %v874
      %v1103 = vpop.f32.mrf.mxu0
      %v1104 = vadd.f32 %v980, %v1103
      %v1105 = vpop.f32.mrf.mxu0
      %v1106 = vpop.f32.mrf.mxu0
      %v1107 = vadd.f32 %v983, %v1106
      %v1108 = vpop.f32.mrf.mxu0
      %1109 = vmatprep.mubr.bf16.mxu0 0
      %1110 = vmatmul.mubr.bf16.gmra.mxu0 %v877
      %v1111 = vpop.f32.mrf.mxu0
      %v1112 = vadd.f32 %v988, %v1111
      %v1113 = vpop.f32.mrf.mxu0
      %v1114 = vpop.f32.mrf.mxu0
      %v1115 = vadd.f32 %v991, %v1114
      %v1116 = vpop.f32.mrf.mxu0
      %1117 = vmatprep.mubr.bf16.mxu0 0
      %1118 = vmatmul.mubr.bf16.gmra.mxu0 %v880
      %v1119 = vpop.f32.mrf.mxu0
      %v1120 = vadd.f32 %v996, %v1119
      %v1121 = vpop.f32.mrf.mxu0
      %v1122 = vpop.f32.mrf.mxu0
      %v1123 = vadd.f32 %v999, %v1122
      %v1124 = vpop.f32.mrf.mxu0
      %1125 = vdwg.mxu0
      %s1126 = scalar_lea.vmem %s3, 16
      %v1127 = vld [vmem:[%s1126] sm:$0xf]
      %v1128 = vld [vmem:[%s1126 + $0x4] sm:$0x3]
      %v1131 = vunpack.c.l.b16 %v1127
      %v1132 = vunpack.c.l.b16 %v1128
      %v1133 = vpack.c.b16 %v1132, %v1131
      %v1135 = vsel %vm854, %v843, 0
      %v1138 = vsel %vm885, %v1133, 0
      %1140 = vmatprep.subr.bf16.mxu0 0
      %1141 = vmatpush1.bf16.msra.mxu0 0
      %1142 = vmatprep.subr.bf16.mxu0 0
      %1143 = vmatpush1.bf16.msra.mxu0 0
      %1144 = vmatprep.subr.bf16.mxu0 0
      %1145 = vmatpush1.bf16.msra.mxu0 0
      %1146 = vmatprep.subr.bf16.mxu0 0
      %1147 = vmatpush1.bf16.msra.mxu0 0
      %1148 = vmatprep.subr.bf16.mxu0 0
      %1149 = vmatpush1.bf16.msra.mxu0 0
      %1150 = vmatprep.subr.bf16.mxu0 0
      %1151 = vmatpush1.bf16.msra.mxu0 0
      %1152 = vmatprep.subr.bf16.mxu0 0
      %1153 = vmatpush1.bf16.msra.mxu0 0
      %1154 = vmatprep.subr.bf16.mxu0 0
      %1155 = vmatpush1.bf16.msra.mxu0 %v1138
      %1156 = vmatprep.subr.bf16.mxu0 0
      %1157 = vmatpush2.bf16.msra.mxu0 0
      %1158 = vmatprep.subr.bf16.mxu0 0
      %1159 = vmatpush2.bf16.msra.mxu0 0
      %1160 = vmatprep.subr.bf16.mxu0 0
      %1161 = vmatpush2.bf16.msra.mxu0 0
      %1162 = vmatprep.subr.bf16.mxu0 0
      %1163 = vmatpush2.bf16.msra.mxu0 0
      %1164 = vmatprep.subr.bf16.mxu0 0
      %1165 = vmatpush2.bf16.msra.mxu0 0
      %1166 = vmatprep.subr.bf16.mxu0 0
      %1167 = vmatpush2.bf16.msra.mxu0 0
      %1168 = vmatprep.subr.bf16.mxu0 0
      %1169 = vmatpush2.bf16.msra.mxu0 0
      %1170 = vmatprep.subr.bf16.mxu0 0
      %1171 = vmatpush2.bf16.msra.mxu0 0
      %1172 = vmatprep.mubr.bf16.mxu0 0
      %1173 = vmatmul.mubr.bf16.gmra.mxu0 %v859
      %v1174 = vpop.f32.mrf.mxu0
      %v1175 = vadd.f32 0.0, %v1174
      %v1176 = vpop.f32.mrf.mxu0
      %v1177 = vpop.f32.mrf.mxu0
      %v1178 = vadd.f32 0.0, %v1177
      %v1179 = vpop.f32.mrf.mxu0
      %1180 = vmatprep.mubr.bf16.mxu0 0
      %1181 = vmatmul.mubr.bf16.gmra.mxu0 %v862
      %v1182 = vpop.f32.mrf.mxu0
      %v1183 = vadd.f32 0.0, %v1182
      %v1184 = vpop.f32.mrf.mxu0
      %v1185 = vpop.f32.mrf.mxu0
      %v1186 = vadd.f32 0.0, %v1185
      %v1187 = vpop.f32.mrf.mxu0
      %1188 = vmatprep.mubr.bf16.mxu0 0
      %1189 = vmatmul.mubr.bf16.gmra.mxu0 %v865
      %v1190 = vpop.f32.mrf.mxu0
      %v1191 = vadd.f32 0.0, %v1190
      %v1192 = vpop.f32.mrf.mxu0
      %v1193 = vpop.f32.mrf.mxu0
      %v1194 = vadd.f32 0.0, %v1193
      %v1195 = vpop.f32.mrf.mxu0
      %1196 = vmatprep.mubr.bf16.mxu0 0
      %1197 = vmatmul.mubr.bf16.gmra.mxu0 %v868
      %v1198 = vpop.f32.mrf.mxu0
      %v1199 = vadd.f32 0.0, %v1198
      %v1200 = vpop.f32.mrf.mxu0
      %v1201 = vpop.f32.mrf.mxu0
      %v1202 = vadd.f32 0.0, %v1201
      %v1203 = vpop.f32.mrf.mxu0
      %1204 = vmatprep.mubr.bf16.mxu0 0
      %1205 = vmatmul.mubr.bf16.gmra.mxu0 %v871
      %v1206 = vpop.f32.mrf.mxu0
      %v1207 = vadd.f32 0.0, %v1206
      %v1208 = vpop.f32.mrf.mxu0
      %v1209 = vpop.f32.mrf.mxu0
      %v1210 = vadd.f32 0.0, %v1209
      %v1211 = vpop.f32.mrf.mxu0
      %1212 = vmatprep.mubr.bf16.mxu0 0
      %1213 = vmatmul.mubr.bf16.gmra.mxu0 %v874
      %v1214 = vpop.f32.mrf.mxu0
      %v1215 = vadd.f32 0.0, %v1214
      %v1216 = vpop.f32.mrf.mxu0
      %v1217 = vpop.f32.mrf.mxu0
      %v1218 = vadd.f32 0.0, %v1217
      %v1219 = vpop.f32.mrf.mxu0
      %1220 = vmatprep.mubr.bf16.mxu0 0
      %1221 = vmatmul.mubr.bf16.gmra.mxu0 %v877
      %v1222 = vpop.f32.mrf.mxu0
      %v1223 = vadd.f32 0.0, %v1222
      %v1224 = vpop.f32.mrf.mxu0
      %v1225 = vpop.f32.mrf.mxu0
      %v1226 = vadd.f32 0.0, %v1225
      %v1227 = vpop.f32.mrf.mxu0
      %1228 = vmatprep.mubr.bf16.mxu0 0
      %1229 = vmatmul.mubr.bf16.gmra.mxu0 %v880
      %v1230 = vpop.f32.mrf.mxu0
      %v1231 = vadd.f32 0.0, %v1230
      %v1232 = vpop.f32.mrf.mxu0
      %v1233 = vpop.f32.mrf.mxu0
      %v1234 = vadd.f32 0.0, %v1233
      %v1235 = vpop.f32.mrf.mxu0
      %1236 = vmatprep.mubr.bf16.mxu0 0
      %1237 = vmatmul.mubr.bf16.gmra.mxu0 %v883
      %v1238 = vpop.f32.mrf.mxu0
      %v1239 = vadd.f32 0.0, %v1238
      %v1240 = vpop.f32.mrf.mxu0
      %v1241 = vpop.f32.mrf.mxu0
      %v1242 = vadd.f32 0.0, %v1241
      %v1243 = vpop.f32.mrf.mxu0
      %1244 = vmatprep.mubr.bf16.mxu0 0
      %1245 = vmatmul.mubr.bf16.gmra.mxu0 %v1135
      %v1246 = vpop.f32.mrf.mxu0
      %v1247 = vadd.f32 0.0, %v1246
      %v1248 = vpop.f32.mrf.mxu0
      %v1249 = vpop.f32.mrf.mxu0
      %v1250 = vadd.f32 0.0, %v1249
      %v1251 = vpop.f32.mrf.mxu0
      %1252 = vdwg.mxu0
      %v1253 = vadd.f32 %v1048, %v1175
      %v1254 = vadd.f32 %v1051, %v1178
      %v1255 = vadd.f32 %v1056, %v1183
      %v1256 = vadd.f32 %v1059, %v1186
      %v1257 = vadd.f32 %v1064, %v1191
      %v1258 = vadd.f32 %v1067, %v1194
      %v1259 = vadd.f32 %v1072, %v1199
      %v1260 = vadd.f32 %v1075, %v1202
      %v1261 = vadd.f32 %v1080, %v1207
      %v1262 = vadd.f32 %v1083, %v1210
      %v1263 = vadd.f32 %v1088, %v1215
      %v1264 = vadd.f32 %v1091, %v1218
      %v1265 = vadd.f32 %v1096, %v1223
      %v1266 = vadd.f32 %v1099, %v1226
      %v1267 = vadd.f32 %v1104, %v1231
      %v1268 = vadd.f32 %v1107, %v1234
      %v1269 = vadd.f32 %v1112, %v1239
      %v1270 = vadd.f32 %v1115, %v1242
      %v1271 = vadd.f32 %v1120, %v1247
      %v1272 = vadd.f32 %v1123, %v1250
      %v1273 = vlaneseq
      %v1274 = vshrl.u32 %v1273, 7
      %v1275 = vadd.s32 %v1274, 8
      %v1276 = vadd.s32 %v1274, 16
      %v1277 = vadd.s32 %v1274, 24
      %v1278 = vadd.s32 %v1274, 32
      %v1279 = vadd.s32 %v1274, 40
      %v1280 = vadd.s32 %v1274, 48
      %v1281 = vadd.s32 %v1274, 56
      %v1282 = vadd.s32 %v1274, 64
      %v1283 = vadd.s32 %v1274, 72
      %v1284 = vadd.s32 %v1274, 80
      %v1285 = vadd.s32 %v1274, 88
      %v1286 = vadd.s32 %v1274, 96
      %v1287 = vadd.s32 %v1274, 104
      %v1288 = vadd.s32 %v1274, 112
      %v1289 = vadd.s32 %v1274, 120
      %v1290 = vadd.s32 %v1274, 128
      %v1291 = vadd.s32 %v1274, 136
      %v1292 = vadd.s32 %v1274, 144
      %v1293 = vadd.s32 %v1274, 152
      %p1294 = scmp.eq.s32.totalorder %s21, 0
      %vm1295 = vcmp.lt.s32.totalorder %v1274, 16
      %vm1296 = vcmp.lt.s32.totalorder %v1275, 16
      %vm1297 = vcmp.lt.s32.totalorder %v1276, 16
      %vm1298 = vcmp.lt.s32.totalorder %v1277, 16
      %vm1299 = vcmp.lt.s32.totalorder %v1278, 16
      %vm1300 = vcmp.lt.s32.totalorder %v1279, 16
      %vm1301 = vcmp.lt.s32.totalorder %v1280, 16
      %vm1302 = vcmp.lt.s32.totalorder %v1281, 16
      %vm1303 = vcmp.lt.s32.totalorder %v1282, 16
      %vm1304 = vcmp.lt.s32.totalorder %v1283, 16
      %vm1305 = vcmp.lt.s32.totalorder %v1284, 16
      %vm1306 = vcmp.lt.s32.totalorder %v1285, 16
      %vm1307 = vcmp.lt.s32.totalorder %v1286, 16
      %vm1308 = vcmp.lt.s32.totalorder %v1287, 16
      %vm1309 = vcmp.lt.s32.totalorder %v1288, 16
      %vm1310 = vcmp.lt.s32.totalorder %v1289, 16
      %vm1311 = vcmp.lt.s32.totalorder %v1290, 16
      %vm1312 = vcmp.lt.s32.totalorder %v1291, 16
      %vm1313 = vcmp.lt.s32.totalorder %v1292, 16
      %vm1314 = vcmp.lt.s32.totalorder %v1293, 16
      %s1315 = scalar_select %p1294, 1, 0
      %v1316 = vstv %s1315
      %vm1317 = vcmp.eq.s32.totalorder %v1316, 1
      %vm1318 = vmand %vm1317, %vm1295
      %vm1319 = vmand %vm1317, %vm1296
      %vm1320 = vmand %vm1317, %vm1297
      %vm1321 = vmand %vm1317, %vm1298
      %vm1322 = vmand %vm1317, %vm1299
      %vm1323 = vmand %vm1317, %vm1300
      %vm1324 = vmand %vm1317, %vm1301
      %vm1325 = vmand %vm1317, %vm1302
      %vm1326 = vmand %vm1317, %vm1303
      %vm1327 = vmand %vm1317, %vm1304
      %vm1328 = vmand %vm1317, %vm1305
      %vm1329 = vmand %vm1317, %vm1306
      %vm1330 = vmand %vm1317, %vm1307
      %vm1331 = vmand %vm1317, %vm1308
      %vm1332 = vmand %vm1317, %vm1309
      %vm1333 = vmand %vm1317, %vm1310
      %vm1334 = vmand %vm1317, %vm1311
      %vm1335 = vmand %vm1317, %vm1312
      %vm1336 = vmand %vm1317, %vm1313
      %vm1337 = vmand %vm1317, %vm1314
      %p1338 = scmp.eq.s32.totalorder %s21, 1
      %vm1339 = vcmp.ge.s32.totalorder %v1274, 144
      %vm1340 = vcmp.ge.s32.totalorder %v1275, 144
      %vm1341 = vcmp.ge.s32.totalorder %v1276, 144
      %vm1342 = vcmp.ge.s32.totalorder %v1277, 144
      %vm1343 = vcmp.ge.s32.totalorder %v1278, 144
      %vm1344 = vcmp.ge.s32.totalorder %v1279, 144
      %vm1345 = vcmp.ge.s32.totalorder %v1280, 144
      %vm1346 = vcmp.ge.s32.totalorder %v1281, 144
      %vm1347 = vcmp.ge.s32.totalorder %v1282, 144
      %vm1348 = vcmp.ge.s32.totalorder %v1283, 144
      %vm1349 = vcmp.ge.s32.totalorder %v1284, 144
      %vm1350 = vcmp.ge.s32.totalorder %v1285, 144
      %vm1351 = vcmp.ge.s32.totalorder %v1286, 144
      %vm1352 = vcmp.ge.s32.totalorder %v1287, 144
      %vm1353 = vcmp.ge.s32.totalorder %v1288, 144
      %vm1354 = vcmp.ge.s32.totalorder %v1289, 144
      %vm1355 = vcmp.ge.s32.totalorder %v1290, 144
      %vm1356 = vcmp.ge.s32.totalorder %v1291, 144
      %vm1357 = vcmp.ge.s32.totalorder %v1292, 144
      %vm1358 = vcmp.ge.s32.totalorder %v1293, 144
      %s1359 = scalar_select %p1338, 1, 0
      %v1360 = vstv %s1359
      %vm1361 = vcmp.eq.s32.totalorder %v1360, 1
      %vm1362 = vmand %vm1361, %vm1339
      %vm1363 = vmand %vm1361, %vm1340
      %vm1364 = vmand %vm1361, %vm1341
      %vm1365 = vmand %vm1361, %vm1342
      %vm1366 = vmand %vm1361, %vm1343
      %vm1367 = vmand %vm1361, %vm1344
      %vm1368 = vmand %vm1361, %vm1345
      %vm1369 = vmand %vm1361, %vm1346
      %vm1370 = vmand %vm1361, %vm1347
      %vm1371 = vmand %vm1361, %vm1348
      %vm1372 = vmand %vm1361, %vm1349
      %vm1373 = vmand %vm1361, %vm1350
      %vm1374 = vmand %vm1361, %vm1351
      %vm1375 = vmand %vm1361, %vm1352
      %vm1376 = vmand %vm1361, %vm1353
      %vm1377 = vmand %vm1361, %vm1354
      %vm1378 = vmand %vm1361, %vm1355
      %vm1379 = vmand %vm1361, %vm1356
      %vm1380 = vmand %vm1361, %vm1357
      %vm1381 = vmand %vm1361, %vm1358
      %vm1382 = vmor %vm1318, %vm1362
      %vm1383 = vmor %vm1319, %vm1363
      %vm1384 = vmor %vm1320, %vm1364
      %vm1385 = vmor %vm1321, %vm1365
      %vm1386 = vmor %vm1322, %vm1366
      %vm1387 = vmor %vm1323, %vm1367
      %vm1388 = vmor %vm1324, %vm1368
      %vm1389 = vmor %vm1325, %vm1369
      %vm1390 = vmor %vm1326, %vm1370
      %vm1391 = vmor %vm1327, %vm1371
      %vm1392 = vmor %vm1328, %vm1372
      %vm1393 = vmor %vm1329, %vm1373
      %vm1394 = vmor %vm1330, %vm1374
      %vm1395 = vmor %vm1331, %vm1375
      %vm1396 = vmor %vm1332, %vm1376
      %vm1397 = vmor %vm1333, %vm1377
      %vm1398 = vmor %vm1334, %vm1378
      %vm1399 = vmor %vm1335, %vm1379
      %vm1400 = vmor %vm1336, %vm1380
      %vm1401 = vmor %vm1337, %vm1381
      %v1402 = vmax.f32 %v1253, 0.0
      %v1403 = vmax.f32 %v1254, 0.0
      %v1404 = vmax.f32 %v1255, 0.0
      %v1405 = vmax.f32 %v1256, 0.0
      %v1406 = vmax.f32 %v1257, 0.0
      %v1407 = vmax.f32 %v1258, 0.0
      %v1408 = vmax.f32 %v1259, 0.0
      %v1409 = vmax.f32 %v1260, 0.0
      %v1410 = vmax.f32 %v1261, 0.0
      %v1411 = vmax.f32 %v1262, 0.0
      %v1412 = vmax.f32 %v1263, 0.0
      %v1413 = vmax.f32 %v1264, 0.0
      %v1414 = vmax.f32 %v1265, 0.0
      %v1415 = vmax.f32 %v1266, 0.0
      %v1416 = vmax.f32 %v1267, 0.0
      %v1417 = vmax.f32 %v1268, 0.0
      %v1418 = vmax.f32 %v1269, 0.0
      %v1419 = vmax.f32 %v1270, 0.0
      %v1420 = vmax.f32 %v1271, 0.0
      %v1421 = vmax.f32 %v1272, 0.0
      %v1422 = vsel %vm1382, 1, 0
      %v1423 = vsel %vm1383, 1, 0
      %v1424 = vsel %vm1384, 1, 0
      %v1425 = vsel %vm1385, 1, 0
      %v1426 = vsel %vm1386, 1, 0
      %v1427 = vsel %vm1387, 1, 0
      %v1428 = vsel %vm1388, 1, 0
      %v1429 = vsel %vm1389, 1, 0
      %v1430 = vsel %vm1390, 1, 0
      %v1431 = vsel %vm1391, 1, 0
      %v1432 = vsel %vm1392, 1, 0
      %v1433 = vsel %vm1393, 1, 0
      %v1434 = vsel %vm1394, 1, 0
      %v1435 = vsel %vm1395, 1, 0
      %v1436 = vsel %vm1396, 1, 0
      %v1437 = vsel %vm1397, 1, 0
      %v1438 = vsel %vm1398, 1, 0
      %v1439 = vsel %vm1399, 1, 0
      %v1440 = vsel %vm1400, 1, 0
      %v1441 = vsel %vm1401, 1, 0
      %vm1442 = vcmp.eq.s32.totalorder %v1422, 1
      %vm1443 = vcmp.eq.s32.totalorder %v1423, 1
      %vm1444 = vcmp.eq.s32.totalorder %v1424, 1
      %vm1445 = vcmp.eq.s32.totalorder %v1425, 1
      %vm1446 = vcmp.eq.s32.totalorder %v1426, 1
      %vm1447 = vcmp.eq.s32.totalorder %v1427, 1
      %vm1448 = vcmp.eq.s32.totalorder %v1428, 1
      %vm1449 = vcmp.eq.s32.totalorder %v1429, 1
      %vm1450 = vcmp.eq.s32.totalorder %v1430, 1
      %vm1451 = vcmp.eq.s32.totalorder %v1431, 1
      %vm1452 = vcmp.eq.s32.totalorder %v1432, 1
      %vm1453 = vcmp.eq.s32.totalorder %v1433, 1
      %vm1454 = vcmp.eq.s32.totalorder %v1434, 1
      %vm1455 = vcmp.eq.s32.totalorder %v1435, 1
      %vm1456 = vcmp.eq.s32.totalorder %v1436, 1
      %vm1457 = vcmp.eq.s32.totalorder %v1437, 1
      %vm1458 = vcmp.eq.s32.totalorder %v1438, 1
      %vm1459 = vcmp.eq.s32.totalorder %v1439, 1
      %vm1460 = vcmp.eq.s32.totalorder %v1440, 1
      %vm1461 = vcmp.eq.s32.totalorder %v1441, 1
      %v1462 = vsel %vm1442, 0.0, %v1402
      %v1463 = vsel %vm1443, 0.0, %v1403
      %v1464 = vsel %vm1444, 0.0, %v1404
      %v1465 = vsel %vm1445, 0.0, %v1405
      %v1466 = vsel %vm1446, 0.0, %v1406
      %v1467 = vsel %vm1447, 0.0, %v1407
      %v1468 = vsel %vm1448, 0.0, %v1408
      %v1469 = vsel %vm1449, 0.0, %v1409
      %v1470 = vsel %vm1450, 0.0, %v1410
      %v1471 = vsel %vm1451, 0.0, %v1411
      %v1472 = vsel %vm1452, 0.0, %v1412
      %v1473 = vsel %vm1453, 0.0, %v1413
      %v1474 = vsel %vm1454, 0.0, %v1414
      %v1475 = vsel %vm1455, 0.0, %v1415
      %v1476 = vsel %vm1456, 0.0, %v1416
      %v1477 = vsel %vm1457, 0.0, %v1417
      %v1478 = vsel %vm1458, 0.0, %v1418
      %v1479 = vsel %vm1459, 0.0, %v1419
      %v1480 = vsel %vm1460, 0.0, %v1420
      %v1481 = vsel %vm1461, 0.0, %v1421
      %v1502 = vrot.slane %v1462, 7
      %v1503 = vrot.slane %v1463, 7
      %v1504 = vsel %vm492, %v1502, %v1503
      %v1505 = vrot.slane %v1464, 7
      %v1506 = vrot.slane %v1465, 7
      %v1507 = vsel %vm492, %v1505, %v1506
      %v1508 = vrot.slane %v1466, 7
      %v1509 = vrot.slane %v1467, 7
      %v1510 = vsel %vm492, %v1508, %v1509
      %v1511 = vrot.slane %v1468, 7
      %v1512 = vrot.slane %v1469, 7
      %v1513 = vsel %vm492, %v1511, %v1512
      %v1514 = vrot.slane %v1470, 7
      %v1515 = vrot.slane %v1471, 7
      %v1516 = vsel %vm492, %v1514, %v1515
      %v1517 = vrot.slane %v1472, 7
      %v1518 = vrot.slane %v1473, 7
      %v1519 = vsel %vm492, %v1517, %v1518
      %v1520 = vrot.slane %v1474, 7
      %v1521 = vrot.slane %v1475, 7
      %v1522 = vsel %vm492, %v1520, %v1521
      %v1523 = vrot.slane %v1476, 7
      %v1524 = vrot.slane %v1477, 7
      %v1525 = vsel %vm492, %v1523, %v1524
      %v1526 = vrot.slane %v1478, 7
      %v1527 = vrot.slane %v1479, 7
      %v1528 = vsel %vm492, %v1526, %v1527
      %v1529 = vrot.slane %v1480, 7
      %v1530 = vrot.slane %v1481, 7
      %v1531 = vsel %vm492, %v1529, %v1530
      %v1552 = vsel %vm492, 0.0, %v1502
      %v1553 = vsel %vm492, 0.0, %v1505
      %v1554 = vsel %vm492, 0.0, %v1508
      %v1555 = vsel %vm492, 0.0, %v1511
      %v1556 = vsel %vm492, 0.0, %v1514
      %v1557 = vsel %vm492, 0.0, %v1517
      %v1558 = vsel %vm492, 0.0, %v1520
      %v1559 = vsel %vm492, 0.0, %v1523
      %v1560 = vsel %vm492, 0.0, %v1526
      %v1561 = vsel %vm492, 0.0, %v1529
      %v1562 = vrot.slane %v1462, 1
      %v1563 = vrot.slane %v1463, 1
      %v1564 = vsel %vm565, %v1562, %v1563
      %v1565 = vrot.slane %v1464, 1
      %v1566 = vrot.slane %v1465, 1
      %v1567 = vsel %vm565, %v1565, %v1566
      %v1568 = vrot.slane %v1466, 1
      %v1569 = vrot.slane %v1467, 1
      %v1570 = vsel %vm565, %v1568, %v1569
      %v1571 = vrot.slane %v1468, 1
      %v1572 = vrot.slane %v1469, 1
      %v1573 = vsel %vm565, %v1571, %v1572
      %v1574 = vrot.slane %v1470, 1
      %v1575 = vrot.slane %v1471, 1
      %v1576 = vsel %vm565, %v1574, %v1575
      %v1577 = vrot.slane %v1472, 1
      %v1578 = vrot.slane %v1473, 1
      %v1579 = vsel %vm565, %v1577, %v1578
      %v1580 = vrot.slane %v1474, 1
      %v1581 = vrot.slane %v1475, 1
      %v1582 = vsel %vm565, %v1580, %v1581
      %v1583 = vrot.slane %v1476, 1
      %v1584 = vrot.slane %v1477, 1
      %v1585 = vsel %vm565, %v1583, %v1584
      %v1586 = vrot.slane %v1478, 1
      %v1587 = vrot.slane %v1479, 1
      %v1588 = vsel %vm565, %v1586, %v1587
      %v1589 = vrot.slane %v1480, 1
      %v1590 = vrot.slane %v1481, 1
      %v1591 = vsel %vm565, %v1589, %v1590
      %v1602 = vsel %vm565, %v1563, 0.0
      %v1603 = vsel %vm565, %v1566, 0.0
      %v1604 = vsel %vm565, %v1569, 0.0
      %v1605 = vsel %vm565, %v1572, 0.0
      %v1606 = vsel %vm565, %v1575, 0.0
      %v1607 = vsel %vm565, %v1578, 0.0
      %v1608 = vsel %vm565, %v1581, 0.0
      %v1609 = vsel %vm565, %v1584, 0.0
      %v1610 = vsel %vm565, %v1587, 0.0
      %v1611 = vsel %vm565, %v1590, 0.0
      %1612 = vrot.lane.b32.xlu0 %v1462, 8
      %v1613 = vpop.permute.xlu0 %1612
      %1614 = vrot.lane.b32.xlu0 %v1463, 8
      %v1615 = vpop.permute.xlu0 %1614
      %1616 = vrot.lane.b32.xlu0 %v1464, 8
      %v1617 = vpop.permute.xlu0 %1616
      %1618 = vrot.lane.b32.xlu0 %v1465, 8
      %v1619 = vpop.permute.xlu0 %1618
      %1620 = vrot.lane.b32.xlu0 %v1466, 8
      %v1621 = vpop.permute.xlu0 %1620
      %1622 = vrot.lane.b32.xlu0 %v1467, 8
      %v1623 = vpop.permute.xlu0 %1622
      %1624 = vrot.lane.b32.xlu0 %v1468, 8
      %v1625 = vpop.permute.xlu0 %1624
      %1626 = vrot.lane.b32.xlu0 %v1469, 8
      %v1627 = vpop.permute.xlu0 %1626
      %1628 = vrot.lane.b32.xlu0 %v1470, 8
      %v1629 = vpop.permute.xlu0 %1628
      %1630 = vrot.lane.b32.xlu0 %v1471, 8
      %v1631 = vpop.permute.xlu0 %1630
      %1632 = vrot.lane.b32.xlu0 %v1472, 8
      %v1633 = vpop.permute.xlu0 %1632
      %1634 = vrot.lane.b32.xlu0 %v1473, 8
      %v1635 = vpop.permute.xlu0 %1634
      %1636 = vrot.lane.b32.xlu0 %v1474, 8
      %v1637 = vpop.permute.xlu0 %1636
      %1638 = vrot.lane.b32.xlu0 %v1475, 8
      %v1639 = vpop.permute.xlu0 %1638
      %1640 = vrot.lane.b32.xlu0 %v1476, 8
      %v1641 = vpop.permute.xlu0 %1640
      %1642 = vrot.lane.b32.xlu0 %v1477, 8
      %v1643 = vpop.permute.xlu0 %1642
      %1644 = vrot.lane.b32.xlu0 %v1478, 8
      %v1645 = vpop.permute.xlu0 %1644
      %1646 = vrot.lane.b32.xlu0 %v1479, 8
      %v1647 = vpop.permute.xlu0 %1646
      %1648 = vrot.lane.b32.xlu0 %v1480, 8
      %v1649 = vpop.permute.xlu0 %1648
      %1650 = vrot.lane.b32.xlu0 %v1481, 8
      %v1651 = vpop.permute.xlu0 %1650
      %1682 = vrot.lane.b32.xlu0 %v1564, 16
      %v1683 = vpop.permute.xlu0 %1682
      %1684 = vrot.lane.b32.xlu0 %v1602, 16
      %v1685 = vpop.permute.xlu0 %1684
      %1686 = vrot.lane.b32.xlu0 %v1567, 16
      %v1687 = vpop.permute.xlu0 %1686
      %1688 = vrot.lane.b32.xlu0 %v1603, 16
      %v1689 = vpop.permute.xlu0 %1688
      %1690 = vrot.lane.b32.xlu0 %v1570, 16
      %v1691 = vpop.permute.xlu0 %1690
      %1692 = vrot.lane.b32.xlu0 %v1604, 16
      %v1693 = vpop.permute.xlu0 %1692
      %1694 = vrot.lane.b32.xlu0 %v1573, 16
      %v1695 = vpop.permute.xlu0 %1694
      %1696 = vrot.lane.b32.xlu0 %v1605, 16
      %v1697 = vpop.permute.xlu0 %1696
      %1698 = vrot.lane.b32.xlu0 %v1576, 16
      %v1699 = vpop.permute.xlu0 %1698
      %1700 = vrot.lane.b32.xlu0 %v1606, 16
      %v1701 = vpop.permute.xlu0 %1700
      %1702 = vrot.lane.b32.xlu0 %v1579, 16
      %v1703 = vpop.permute.xlu0 %1702
      %1704 = vrot.lane.b32.xlu0 %v1607, 16
      %v1705 = vpop.permute.xlu0 %1704
      %1706 = vrot.lane.b32.xlu0 %v1582, 16
      %v1707 = vpop.permute.xlu0 %1706
      %1708 = vrot.lane.b32.xlu0 %v1608, 16
      %v1709 = vpop.permute.xlu0 %1708
      %1710 = vrot.lane.b32.xlu0 %v1585, 16
      %v1711 = vpop.permute.xlu0 %1710
      %1712 = vrot.lane.b32.xlu0 %v1609, 16
      %v1713 = vpop.permute.xlu0 %1712
      %1714 = vrot.lane.b32.xlu0 %v1588, 16
      %v1715 = vpop.permute.xlu0 %1714
      %1716 = vrot.lane.b32.xlu0 %v1610, 16
      %v1717 = vpop.permute.xlu0 %1716
      %1718 = vrot.lane.b32.xlu0 %v1591, 16
      %v1719 = vpop.permute.xlu0 %1718
      %1720 = vrot.lane.b32.xlu0 %v1611, 16
      %v1721 = vpop.permute.xlu0 %1720
      %v1742 = vsel %vm807, %v1552, %v1613
      %v1743 = vsel %vm807, %v1504, %v1615
      %v1744 = vsel %vm807, %v1553, %v1617
      %v1745 = vsel %vm807, %v1507, %v1619
      %v1746 = vsel %vm807, %v1554, %v1621
      %v1747 = vsel %vm807, %v1510, %v1623
      %v1748 = vsel %vm807, %v1555, %v1625
      %v1749 = vsel %vm807, %v1513, %v1627
      %v1750 = vsel %vm807, %v1556, %v1629
      %v1751 = vsel %vm807, %v1516, %v1631
      %v1752 = vsel %vm807, %v1557, %v1633
      %v1753 = vsel %vm807, %v1519, %v1635
      %v1754 = vsel %vm807, %v1558, %v1637
      %v1755 = vsel %vm807, %v1522, %v1639
      %v1756 = vsel %vm807, %v1559, %v1641
      %v1757 = vsel %vm807, %v1525, %v1643
      %v1758 = vsel %vm807, %v1560, %v1645
      %v1759 = vsel %vm807, %v1528, %v1647
      %v1760 = vsel %vm807, %v1561, %v1649
      %v1761 = vsel %vm807, %v1531, %v1651
      %vm1762 = vcmask 130048
      %v1763 = vsel %vm1762, %v1742, %v1683
      %v1764 = vsel %vm1762, %v1743, %v1685
      %v1765 = vsel %vm1762, %v1744, %v1687
      %v1766 = vsel %vm1762, %v1745, %v1689
      %v1767 = vsel %vm1762, %v1746, %v1691
      %v1768 = vsel %vm1762, %v1747, %v1693
      %v1769 = vsel %vm1762, %v1748, %v1695
      %v1770 = vsel %vm1762, %v1749, %v1697
      %v1771 = vsel %vm1762, %v1750, %v1699
      %v1772 = vsel %vm1762, %v1751, %v1701
      %v1773 = vsel %vm1762, %v1752, %v1703
      %v1774 = vsel %vm1762, %v1753, %v1705
      %v1775 = vsel %vm1762, %v1754, %v1707
      %v1776 = vsel %vm1762, %v1755, %v1709
      %v1777 = vsel %vm1762, %v1756, %v1711
      %v1778 = vsel %vm1762, %v1757, %v1713
      %v1779 = vsel %vm1762, %v1758, %v1715
      %v1780 = vsel %vm1762, %v1759, %v1717
      %v1781 = vsel %vm1762, %v1760, %v1719
      %v1782 = vsel %vm1762, %v1761, %v1721
      %v1783 = vpack.c.bf16 %v1764, %v1763
      %v1784 = vpack.c.bf16 %v1766, %v1765
      %v1785 = vpack.c.bf16 %v1768, %v1767
      %v1786 = vpack.c.bf16 %v1770, %v1769
      %v1787 = vpack.c.bf16 %v1772, %v1771
      %v1788 = vpack.c.bf16 %v1774, %v1773
      %v1789 = vpack.c.bf16 %v1776, %v1775
      %v1790 = vpack.c.bf16 %v1778, %v1777
      %v1791 = vpack.c.bf16 %v1780, %v1779
      %v1792 = vpack.c.bf16 %v1782, %v1781
      %v1793 = vld [vmem:[%s4] sm:$0xf]
      %v1794 = vld [vmem:[%s4 + $0x4] sm:$0xf]
      %v1795 = vld [vmem:[%s4 + $0x8] sm:$0xf]
      %s1796 = scalar_lea.vmem %s4, 12
      %v1797 = vld [vmem:[%s1796] sm:$0xf]
      %v1798 = vld [vmem:[%s1796 + $0x4] sm:$0xf]
      %v1799 = vld [vmem:[%s1796 + $0x8] sm:$0xf]
      %v1803 = vunpack.c.l.b16 %v1797
      %v1804 = vunpack.c.l.b16 %v1798
      %v1805 = vunpack.c.l.b16 %v1799
      %v1806 = vpack.c.b16 %v1804, %v1803
      %v1807 = vpack.c.b16 %v1805, %v1805
      %vm1809 = vcmask 195584
      %v1811 = vsel %vm1809, %v1784, 0
      %v1814 = vsel %vm1809, %v1785, 0
      %v1817 = vsel %vm1809, %v1786, 0
      %v1820 = vsel %vm1809, %v1787, 0
      %v1823 = vsel %vm1809, %v1788, 0
      %v1826 = vsel %vm1809, %v1789, 0
      %v1829 = vsel %vm1809, %v1790, 0
      %v1832 = vsel %vm1809, %v1791, 0
      %vm1834 = vcmask 1043456
      %v1836 = vsel %vm1834, %v1807, 0
      %1838 = vmatprep.subr.bf16.mxu0 0
      %1839 = vmatpush1.bf16.msra.mxu0 0
      %1840 = vmatprep.subr.bf16.mxu0 0
      %1841 = vmatpush1.bf16.msra.mxu0 0
      %1842 = vmatprep.subr.bf16.mxu0 0
      %1843 = vmatpush1.bf16.msra.mxu0 0
      %1844 = vmatprep.subr.bf16.mxu0 0
      %1845 = vmatpush1.bf16.msra.mxu0 0
      %1846 = vmatprep.subr.bf16.mxu0 0
      %1847 = vmatpush1.bf16.msra.mxu0 0
      %1848 = vmatprep.subr.bf16.mxu0 0
      %1849 = vmatpush1.bf16.msra.mxu0 0
      %1850 = vmatprep.subr.bf16.mxu0 0
      %1851 = vmatpush1.bf16.msra.mxu0 %v1836
      %1852 = vmatprep.subr.bf16.mxu0 0
      %1853 = vmatpush1.bf16.msra.mxu0 %v1806
      %1854 = vmatprep.subr.bf16.mxu0 0
      %1855 = vmatpush2.bf16.msra.mxu0 0
      %1856 = vmatprep.subr.bf16.mxu0 0
      %1857 = vmatpush2.bf16.msra.mxu0 0
      %1858 = vmatprep.subr.bf16.mxu0 0
      %1859 = vmatpush2.bf16.msra.mxu0 0
      %1860 = vmatprep.subr.bf16.mxu0 0
      %1861 = vmatpush2.bf16.msra.mxu0 0
      %1862 = vmatprep.subr.bf16.mxu0 0
      %1863 = vmatpush2.bf16.msra.mxu0 0
      %1864 = vmatprep.subr.bf16.mxu0 0
      %1865 = vmatpush2.bf16.msra.mxu0 0
      %1866 = vmatprep.subr.bf16.mxu0 0
      %1867 = vmatpush2.bf16.msra.mxu0 0
      %1868 = vmatprep.subr.bf16.mxu0 0
      %1869 = vmatpush2.bf16.msra.mxu0 0
      %1870 = vmatprep.mubr.bf16.mxu0 0
      %1871 = vmatmul.mubr.bf16.gmra.mxu0 %v1811
      %v1872 = vpop.f32.mrf.mxu0
      %v1873 = vadd.f32 0.0, %v1872
      %v1874 = vpop.f32.mrf.mxu0
      %v1875 = vpop.f32.mrf.mxu0
      %v1876 = vadd.f32 0.0, %v1875
      %v1877 = vpop.f32.mrf.mxu0
      %1878 = vmatprep.mubr.bf16.mxu0 0
      %1879 = vmatmul.mubr.bf16.gmra.mxu0 %v1814
      %v1880 = vpop.f32.mrf.mxu0
      %v1881 = vadd.f32 0.0, %v1880
      %v1882 = vpop.f32.mrf.mxu0
      %v1883 = vpop.f32.mrf.mxu0
      %v1884 = vadd.f32 0.0, %v1883
      %v1885 = vpop.f32.mrf.mxu0
      %1886 = vmatprep.mubr.bf16.mxu0 0
      %1887 = vmatmul.mubr.bf16.gmra.mxu0 %v1817
      %v1888 = vpop.f32.mrf.mxu0
      %v1889 = vadd.f32 0.0, %v1888
      %v1890 = vpop.f32.mrf.mxu0
      %v1891 = vpop.f32.mrf.mxu0
      %v1892 = vadd.f32 0.0, %v1891
      %v1893 = vpop.f32.mrf.mxu0
      %1894 = vmatprep.mubr.bf16.mxu0 0
      %1895 = vmatmul.mubr.bf16.gmra.mxu0 %v1820
      %v1896 = vpop.f32.mrf.mxu0
      %v1897 = vadd.f32 0.0, %v1896
      %v1898 = vpop.f32.mrf.mxu0
      %v1899 = vpop.f32.mrf.mxu0
      %v1900 = vadd.f32 0.0, %v1899
      %v1901 = vpop.f32.mrf.mxu0
      %1902 = vmatprep.mubr.bf16.mxu0 0
      %1903 = vmatmul.mubr.bf16.gmra.mxu0 %v1823
      %v1904 = vpop.f32.mrf.mxu0
      %v1905 = vadd.f32 0.0, %v1904
      %v1906 = vpop.f32.mrf.mxu0
      %v1907 = vpop.f32.mrf.mxu0
      %v1908 = vadd.f32 0.0, %v1907
      %v1909 = vpop.f32.mrf.mxu0
      %1910 = vmatprep.mubr.bf16.mxu0 0
      %1911 = vmatmul.mubr.bf16.gmra.mxu0 %v1826
      %v1912 = vpop.f32.mrf.mxu0
      %v1913 = vadd.f32 0.0, %v1912
      %v1914 = vpop.f32.mrf.mxu0
      %v1915 = vpop.f32.mrf.mxu0
      %v1916 = vadd.f32 0.0, %v1915
      %v1917 = vpop.f32.mrf.mxu0
      %1918 = vmatprep.mubr.bf16.mxu0 0
      %1919 = vmatmul.mubr.bf16.gmra.mxu0 %v1829
      %v1920 = vpop.f32.mrf.mxu0
      %v1921 = vadd.f32 0.0, %v1920
      %v1922 = vpop.f32.mrf.mxu0
      %v1923 = vpop.f32.mrf.mxu0
      %v1924 = vadd.f32 0.0, %v1923
      %v1925 = vpop.f32.mrf.mxu0
      %1926 = vmatprep.mubr.bf16.mxu0 0
      %1927 = vmatmul.mubr.bf16.gmra.mxu0 %v1832
      %v1928 = vpop.f32.mrf.mxu0
      %v1929 = vadd.f32 0.0, %v1928
      %v1930 = vpop.f32.mrf.mxu0
      %v1931 = vpop.f32.mrf.mxu0
      %v1932 = vadd.f32 0.0, %v1931
      %v1933 = vpop.f32.mrf.mxu0
      %1934 = vdwg.mxu0
      %v1938 = vunpack.c.l.b16 %v1793
      %v1939 = vunpack.c.l.b16 %v1794
      %v1940 = vunpack.c.l.b16 %v1795
      %v1941 = vpack.c.b16 %v1939, %v1938
      %v1942 = vpack.c.b16 %v1940, %v1940
      %v1945 = vsel %vm1809, %v1783, 0
      %v1948 = vsel %vm1834, %v1942, 0
      %1950 = vmatprep.subr.bf16.mxu0 0
      %1951 = vmatpush1.bf16.msra.mxu0 0
      %1952 = vmatprep.subr.bf16.mxu0 0
      %1953 = vmatpush1.bf16.msra.mxu0 0
      %1954 = vmatprep.subr.bf16.mxu0 0
      %1955 = vmatpush1.bf16.msra.mxu0 0
      %1956 = vmatprep.subr.bf16.mxu0 0
      %1957 = vmatpush1.bf16.msra.mxu0 0
      %1958 = vmatprep.subr.bf16.mxu0 0
      %1959 = vmatpush1.bf16.msra.mxu0 0
      %1960 = vmatprep.subr.bf16.mxu0 0
      %1961 = vmatpush1.bf16.msra.mxu0 0
      %1962 = vmatprep.subr.bf16.mxu0 0
      %1963 = vmatpush1.bf16.msra.mxu0 %v1948
      %1964 = vmatprep.subr.bf16.mxu0 0
      %1965 = vmatpush1.bf16.msra.mxu0 %v1941
      %1966 = vmatprep.subr.bf16.mxu0 0
      %1967 = vmatpush2.bf16.msra.mxu0 0
      %1968 = vmatprep.subr.bf16.mxu0 0
      %1969 = vmatpush2.bf16.msra.mxu0 0
      %1970 = vmatprep.subr.bf16.mxu0 0
      %1971 = vmatpush2.bf16.msra.mxu0 0
      %1972 = vmatprep.subr.bf16.mxu0 0
      %1973 = vmatpush2.bf16.msra.mxu0 0
      %1974 = vmatprep.subr.bf16.mxu0 0
      %1975 = vmatpush2.bf16.msra.mxu0 0
      %1976 = vmatprep.subr.bf16.mxu0 0
      %1977 = vmatpush2.bf16.msra.mxu0 0
      %1978 = vmatprep.subr.bf16.mxu0 0
      %1979 = vmatpush2.bf16.msra.mxu0 0
      %1980 = vmatprep.subr.bf16.mxu0 0
      %1981 = vmatpush2.bf16.msra.mxu0 0
      %1982 = vmatprep.mubr.bf16.mxu0 0
      %1983 = vmatmul.mubr.bf16.gmra.mxu0 %v1945
      %v1984 = vpop.f32.mrf.mxu0
      %v1985 = vadd.f32 %v1873, %v1984
      %v1986 = vpop.f32.mrf.mxu0
      %v1987 = vpop.f32.mrf.mxu0
      %v1988 = vadd.f32 %v1876, %v1987
      %v1989 = vpop.f32.mrf.mxu0
      %1990 = vmatprep.mubr.bf16.mxu0 0
      %1991 = vmatmul.mubr.bf16.gmra.mxu0 %v1811
      %v1992 = vpop.f32.mrf.mxu0
      %v1993 = vadd.f32 %v1881, %v1992
      %v1994 = vpop.f32.mrf.mxu0
      %v1995 = vpop.f32.mrf.mxu0
      %v1996 = vadd.f32 %v1884, %v1995
      %v1997 = vpop.f32.mrf.mxu0
      %1998 = vmatprep.mubr.bf16.mxu0 0
      %1999 = vmatmul.mubr.bf16.gmra.mxu0 %v1814
      %v2000 = vpop.f32.mrf.mxu0
      %v2001 = vadd.f32 %v1889, %v2000
      %v2002 = vpop.f32.mrf.mxu0
      %v2003 = vpop.f32.mrf.mxu0
      %v2004 = vadd.f32 %v1892, %v2003
      %v2005 = vpop.f32.mrf.mxu0
      %2006 = vmatprep.mubr.bf16.mxu0 0
      %2007 = vmatmul.mubr.bf16.gmra.mxu0 %v1817
      %v2008 = vpop.f32.mrf.mxu0
      %v2009 = vadd.f32 %v1897, %v2008
      %v2010 = vpop.f32.mrf.mxu0
      %v2011 = vpop.f32.mrf.mxu0
      %v2012 = vadd.f32 %v1900, %v2011
      %v2013 = vpop.f32.mrf.mxu0
      %2014 = vmatprep.mubr.bf16.mxu0 0
      %2015 = vmatmul.mubr.bf16.gmra.mxu0 %v1820
      %v2016 = vpop.f32.mrf.mxu0
      %v2017 = vadd.f32 %v1905, %v2016
      %v2018 = vpop.f32.mrf.mxu0
      %v2019 = vpop.f32.mrf.mxu0
      %v2020 = vadd.f32 %v1908, %v2019
      %v2021 = vpop.f32.mrf.mxu0
      %2022 = vmatprep.mubr.bf16.mxu0 0
      %2023 = vmatmul.mubr.bf16.gmra.mxu0 %v1823
      %v2024 = vpop.f32.mrf.mxu0
      %v2025 = vadd.f32 %v1913, %v2024
      %v2026 = vpop.f32.mrf.mxu0
      %v2027 = vpop.f32.mrf.mxu0
      %v2028 = vadd.f32 %v1916, %v2027
      %v2029 = vpop.f32.mrf.mxu0
      %2030 = vmatprep.mubr.bf16.mxu0 0
      %2031 = vmatmul.mubr.bf16.gmra.mxu0 %v1826
      %v2032 = vpop.f32.mrf.mxu0
      %v2033 = vadd.f32 %v1921, %v2032
      %v2034 = vpop.f32.mrf.mxu0
      %v2035 = vpop.f32.mrf.mxu0
      %v2036 = vadd.f32 %v1924, %v2035
      %v2037 = vpop.f32.mrf.mxu0
      %2038 = vmatprep.mubr.bf16.mxu0 0
      %2039 = vmatmul.mubr.bf16.gmra.mxu0 %v1829
      %v2040 = vpop.f32.mrf.mxu0
      %v2041 = vadd.f32 %v1929, %v2040
      %v2042 = vpop.f32.mrf.mxu0
      %v2043 = vpop.f32.mrf.mxu0
      %v2044 = vadd.f32 %v1932, %v2043
      %v2045 = vpop.f32.mrf.mxu0
      %2046 = vdwg.mxu0
      %s2047 = scalar_lea.vmem %s4, 24
      %v2048 = vld [vmem:[%s2047] sm:$0xf]
      %v2049 = vld [vmem:[%s2047 + $0x4] sm:$0xf]
      %v2050 = vld [vmem:[%s2047 + $0x8] sm:$0xf]
      %v2054 = vunpack.c.l.b16 %v2048
      %v2055 = vunpack.c.l.b16 %v2049
      %v2056 = vunpack.c.l.b16 %v2050
      %v2057 = vpack.c.b16 %v2055, %v2054
      %v2058 = vpack.c.b16 %v2056, %v2056
      %v2061 = vsel %vm1809, %v1792, 0
      %v2064 = vsel %vm1834, %v2058, 0
      %2066 = vmatprep.subr.bf16.mxu0 0
      %2067 = vmatpush1.bf16.msra.mxu0 0
      %2068 = vmatprep.subr.bf16.mxu0 0
      %2069 = vmatpush1.bf16.msra.mxu0 0
      %2070 = vmatprep.subr.bf16.mxu0 0
      %2071 = vmatpush1.bf16.msra.mxu0 0
      %2072 = vmatprep.subr.bf16.mxu0 0
      %2073 = vmatpush1.bf16.msra.mxu0 0
      %2074 = vmatprep.subr.bf16.mxu0 0
      %2075 = vmatpush1.bf16.msra.mxu0 0
      %2076 = vmatprep.subr.bf16.mxu0 0
      %2077 = vmatpush1.bf16.msra.mxu0 0
      %2078 = vmatprep.subr.bf16.mxu0 0
      %2079 = vmatpush1.bf16.msra.mxu0 %v2064
      %2080 = vmatprep.subr.bf16.mxu0 0
      %2081 = vmatpush1.bf16.msra.mxu0 %v2057
      %2082 = vmatprep.subr.bf16.mxu0 0
      %2083 = vmatpush2.bf16.msra.mxu0 0
      %2084 = vmatprep.subr.bf16.mxu0 0
      %2085 = vmatpush2.bf16.msra.mxu0 0
      %2086 = vmatprep.subr.bf16.mxu0 0
      %2087 = vmatpush2.bf16.msra.mxu0 0
      %2088 = vmatprep.subr.bf16.mxu0 0
      %2089 = vmatpush2.bf16.msra.mxu0 0
      %2090 = vmatprep.subr.bf16.mxu0 0
      %2091 = vmatpush2.bf16.msra.mxu0 0
      %2092 = vmatprep.subr.bf16.mxu0 0
      %2093 = vmatpush2.bf16.msra.mxu0 0
      %2094 = vmatprep.subr.bf16.mxu0 0
      %2095 = vmatpush2.bf16.msra.mxu0 0
      %2096 = vmatprep.subr.bf16.mxu0 0
      %2097 = vmatpush2.bf16.msra.mxu0 0
      %2098 = vmatprep.mubr.bf16.mxu0 0
      %2099 = vmatmul.mubr.bf16.gmra.mxu0 %v1814
      %v2100 = vpop.f32.mrf.mxu0
      %v2101 = vadd.f32 0.0, %v2100
      %v2102 = vpop.f32.mrf.mxu0
      %v2103 = vpop.f32.mrf.mxu0
      %v2104 = vadd.f32 0.0, %v2103
      %v2105 = vpop.f32.mrf.mxu0
      %2106 = vmatprep.mubr.bf16.mxu0 0
      %2107 = vmatmul.mubr.bf16.gmra.mxu0 %v1817
      %v2108 = vpop.f32.mrf.mxu0
      %v2109 = vadd.f32 0.0, %v2108
      %v2110 = vpop.f32.mrf.mxu0
      %v2111 = vpop.f32.mrf.mxu0
      %v2112 = vadd.f32 0.0, %v2111
      %v2113 = vpop.f32.mrf.mxu0
      %2114 = vmatprep.mubr.bf16.mxu0 0
      %2115 = vmatmul.mubr.bf16.gmra.mxu0 %v1820
      %v2116 = vpop.f32.mrf.mxu0
      %v2117 = vadd.f32 0.0, %v2116
      %v2118 = vpop.f32.mrf.mxu0
      %v2119 = vpop.f32.mrf.mxu0
      %v2120 = vadd.f32 0.0, %v2119
      %v2121 = vpop.f32.mrf.mxu0
      %2122 = vmatprep.mubr.bf16.mxu0 0
      %2123 = vmatmul.mubr.bf16.gmra.mxu0 %v1823
      %v2124 = vpop.f32.mrf.mxu0
      %v2125 = vadd.f32 0.0, %v2124
      %v2126 = vpop.f32.mrf.mxu0
      %v2127 = vpop.f32.mrf.mxu0
      %v2128 = vadd.f32 0.0, %v2127
      %v2129 = vpop.f32.mrf.mxu0
      %2130 = vmatprep.mubr.bf16.mxu0 0
      %2131 = vmatmul.mubr.bf16.gmra.mxu0 %v1826
      %v2132 = vpop.f32.mrf.mxu0
      %v2133 = vadd.f32 0.0, %v2132
      %v2134 = vpop.f32.mrf.mxu0
      %v2135 = vpop.f32.mrf.mxu0
      %v2136 = vadd.f32 0.0, %v2135
      %v2137 = vpop.f32.mrf.mxu0
      %2138 = vmatprep.mubr.bf16.mxu0 0
      %2139 = vmatmul.mubr.bf16.gmra.mxu0 %v1829
      %v2140 = vpop.f32.mrf.mxu0
      %v2141 = vadd.f32 0.0, %v2140
      %v2142 = vpop.f32.mrf.mxu0
      %v2143 = vpop.f32.mrf.mxu0
      %v2144 = vadd.f32 0.0, %v2143
      %v2145 = vpop.f32.mrf.mxu0
      %2146 = vmatprep.mubr.bf16.mxu0 0
      %2147 = vmatmul.mubr.bf16.gmra.mxu0 %v1832
      %v2148 = vpop.f32.mrf.mxu0
      %v2149 = vadd.f32 0.0, %v2148
      %v2150 = vpop.f32.mrf.mxu0
      %v2151 = vpop.f32.mrf.mxu0
      %v2152 = vadd.f32 0.0, %v2151
      %v2153 = vpop.f32.mrf.mxu0
      %2154 = vmatprep.mubr.bf16.mxu0 0
      %2155 = vmatmul.mubr.bf16.gmra.mxu0 %v2061
      %v2156 = vpop.f32.mrf.mxu0
      %v2157 = vadd.f32 0.0, %v2156
      %v2158 = vpop.f32.mrf.mxu0
      %v2159 = vpop.f32.mrf.mxu0
      %v2160 = vadd.f32 0.0, %v2159
      %v2161 = vpop.f32.mrf.mxu0
      %2162 = vdwg.mxu0
      %v2163 = vadd.f32 %v1985, %v2101
      %v2164 = vadd.f32 %v1988, %v2104
      %v2165 = vadd.f32 %v1993, %v2109
      %v2166 = vadd.f32 %v1996, %v2112
      %v2167 = vadd.f32 %v2001, %v2117
      %v2168 = vadd.f32 %v2004, %v2120
      %v2169 = vadd.f32 %v2009, %v2125
      %v2170 = vadd.f32 %v2012, %v2128
      %v2171 = vadd.f32 %v2017, %v2133
      %v2172 = vadd.f32 %v2020, %v2136
      %v2173 = vadd.f32 %v2025, %v2141
      %v2174 = vadd.f32 %v2028, %v2144
      %v2175 = vadd.f32 %v2033, %v2149
      %v2176 = vadd.f32 %v2036, %v2152
      %v2177 = vadd.f32 %v2041, %v2157
      %v2178 = vadd.f32 %v2044, %v2160
      %v2179 = vmax.f32 %v2163, 0.0
      %v2180 = vmax.f32 %v2164, 0.0
      %v2181 = vmax.f32 %v2165, 0.0
      %v2182 = vmax.f32 %v2166, 0.0
      %v2183 = vmax.f32 %v2167, 0.0
      %v2184 = vmax.f32 %v2168, 0.0
      %v2185 = vmax.f32 %v2169, 0.0
      %v2186 = vmax.f32 %v2170, 0.0
      %v2187 = vmax.f32 %v2171, 0.0
      %v2188 = vmax.f32 %v2172, 0.0
      %v2189 = vmax.f32 %v2173, 0.0
      %v2190 = vmax.f32 %v2174, 0.0
      %v2191 = vmax.f32 %v2175, 0.0
      %v2192 = vmax.f32 %v2176, 0.0
      %v2193 = vmax.f32 %v2177, 0.0
      %v2194 = vmax.f32 %v2178, 0.0
      %2195 = vst.msk [vmem:[%s401] sm:$0xff] %vm782, %v2179
      %2196 = vst.msk [vmem:[%s401 + $0x8] sm:$0xff] %vm782, %v2180
      %2197 = vst.msk [vmem:[%s401 + $0x10] sm:$0xff] %vm782, %v2181
      %2198 = vst.msk [vmem:[%s401 + $0x18] sm:$0xff] %vm782, %v2182
      %2199 = vst.msk [vmem:[%s401 + $0x20] sm:$0xff] %vm782, %v2183
      %2200 = vst.msk [vmem:[%s401 + $0x28] sm:$0xff] %vm782, %v2184
      %2201 = vst.msk [vmem:[%s401 + $0x30] sm:$0xff] %vm782, %v2185
      %2202 = vst.msk [vmem:[%s401 + $0x38] sm:$0xff] %vm782, %v2186
      %2203 = vst.msk [vmem:[%s401 + $0x40] sm:$0xff] %vm782, %v2187
      %2204 = vst.msk [vmem:[%s401 + $0x48] sm:$0xff] %vm782, %v2188
      %2205 = vst.msk [vmem:[%s401 + $0x50] sm:$0xff] %vm782, %v2189
      %2206 = vst.msk [vmem:[%s401 + $0x58] sm:$0xff] %vm782, %v2190
      %2207 = vst.msk [vmem:[%s401 + $0x60] sm:$0xff] %vm782, %v2191
      %2208 = vst.msk [vmem:[%s401 + $0x68] sm:$0xff] %vm782, %v2192
      %2209 = vst.msk [vmem:[%s401 + $0x70] sm:$0xff] %vm782, %v2193
      %2210 = vst.msk [vmem:[%s401 + $0x78] sm:$0xff] %vm782, %v2194
      %s2211 = smul.u32 8, %s21
      %p2212 = scmp.lt.s32.totalorder %s20, 1
      %s2213 = scalar_select %p2212, %s20, 1
      %p2214 = scmp.lt.s32.totalorder %s2211, 15
      %s2215 = scalar_select %p2214, %s2211, 15
      %s2216 = smul.addr %s2215, 2
      %s2217 = smul.addr %s2213, 32
      %s2218 = sadd.s32 %s2216, %s2217
      %s2219 = smul.addr %s2218, 8
      %s2220 = scalar_lea.vmem %s5, %s2219
      // Predicated region
      $region41: #{tpu_custom_call.1} parent=39 // pred_check
        %p2221 = pneg %p190
      $region42: #{tpu_custom_call.1} parent=39 // pred_check_branch
        %2223 = sbr.rel (%p2221) target = $region44
      $region43: #{tpu_custom_call.1} parent=39 // pred_region
        %s2224 = smul.u32 8, %s21
      $region44: #{tpu_custom_call.1} parent=39 // pred_fallthru
        _
    $region40: #{tpu_custom_call.1} parent=5 // pred_fallthru
      _
    %p2225 = scmp.le.s32.totalorder 2, %s11
    // Predicated region
    $region45: #{tpu_custom_call.1} parent=5 // pred_check
      %p2226 = pneg %p2225
    $region46: #{tpu_custom_call.1} parent=5 // pred_check_branch
      %2228 = sbr.rel (%p2226) target = $region48
    $region47: #{tpu_custom_call.1} parent=5 // pred_region
      %s2229 = ssub.s32 %s11, 2
      // Predicated region
      $region49: #{tpu_custom_call.1} parent=47 // pred_check
        %p2230 = pneg %p196
      $region50: #{tpu_custom_call.1} parent=47 // pred_check_branch
        %2232 = sbr.rel (%p2230) target = $region52
      $region51: #{tpu_custom_call.1} parent=47 // pred_region
        %s2233 = smul.u32 8, %s23
        %p2234 = scmp.lt.s32.totalorder %s22, 1
        %s2235 = scalar_select %p2234, %s22, 1
        %p2236 = scmp.lt.s32.totalorder %s2233, 15
        %s2237 = scalar_select %p2236, %s2233, 15
        %s2238 = smul.addr %s2237, 2
        %s2239 = smul.addr %s2235, 32
        %s2240 = sadd.s32 %s2238, %s2239
        %s2241 = smul.addr %s2240, 8
        %s2242 = scalar_lea.vmem %s5, %s2241
      $region52: #{tpu_custom_call.1} parent=47 // pred_fallthru
        _
    $region48: #{tpu_custom_call.1} parent=5 // pred_fallthru
      _
  $region6: #{tpu_custom_call.1} parent=0 // loop_footer
    %s15 = sadd.s32 1, %s11
  $region7: #{tpu_custom_call.1} parent=0 // loop_footer_branch
    %10 = sbr.rel target = $region3
  $region8: #{tpu_custom_call.1} parent=0 // loop_exit
    _

</llo_original>
